<compile_context>
chip_gen: v7x
topology: tpu7x:2x2x1
jax: 0.10.0
libtpu: 0.0.40
codegen_flags: <defaults>
</compile_context>

<pallas_src>
import functools

import jax
import jax.numpy as jnp
from jax.experimental import pallas as pl
from jax.experimental.pallas import tpu as pltpu


def _round_up(n, m):
    return (n + m - 1) // m * m


def _pick_block_b(B):
    # Batch several sequences per grid step (fills sublanes / MXU M dimension and
    # amortizes the ~0.35us per-step pipeline overhead), but keep >= 2 grid steps
    # when possible so v7x's two TensorCores both get work.
    for tb in (8, 4, 2):
        if B % tb == 0 and B // tb >= 2:
            return tb
    return 1


def mini_transformer_kernel(x_ref, wqkv_ref, wo_ref, w1_ref, w2_ref, vecs_ref,
                            o_ref, *, e_real):
    TB, L, EP = x_ref.shape
    FP = w1_ref.shape[1]
    cdt = wqkv_ref.dtype                       # matmul compute dtype (bf16 or f32)
    inv_e = 1.0 / float(e_real)
    scale = float(e_real) ** -0.5

    x = x_ref[...]                             # (TB, L, EP) f32, padded lanes are 0
    x2 = x.reshape(TB * L, EP)                 # lane dim unchanged -> cheap reshape

    # Fused per-feature vectors: [bq, bk, bv, bo, g1, be1, b1, b2, g2, be2]
    vecs = vecs_ref[...]                       # (10, W) f32
    bq, bk, bv = vecs[0:1, :EP], vecs[1:2, :EP], vecs[2:3, :EP]
    bo = vecs[3:4, :EP]
    g1, be1 = vecs[4:5, :EP], vecs[5:6, :EP]
    b1 = vecs[6:7, :FP]
    b2 = vecs[7:8, :EP]
    g2, be2 = vecs[8:9, :EP], vecs[9:10, :EP]

    # Mask over the real (unpadded) embedding lanes for LayerNorm statistics.
    lane = jax.lax.broadcasted_iota(jnp.int32, (1, EP), 1)
    emask = (lane < e_real).astype(jnp.float32)

    def layernorm(h, g, b):
        # h's padded lanes are zero, so the plain sum already equals the real sum.
        mu = jnp.sum(h, axis=-1, keepdims=True) * inv_e
        d = (h - mu) * emask
        var = jnp.sum(d * d, axis=-1, keepdims=True) * inv_e
        return d * jax.lax.rsqrt(var + 1e-5) * g + b

    # ---- single-head self attention: fused QKV projection (one MXU pass) ----
    qkv = jnp.dot(x2.astype(cdt), wqkv_ref[...],
                  preferred_element_type=jnp.float32)        # (TB*L, 3EP)
    # Scale q (not the (L,L) score matrix): fewer VPU multiplies once L > E.
    q = (qkv[:, 0 * EP:1 * EP] + bq) * scale
    k = qkv[:, 1 * EP:2 * EP] + bk
    v = qkv[:, 2 * EP:3 * EP] + bv

    q3 = q.reshape(TB, L, EP).astype(cdt)
    k3 = k.reshape(TB, L, EP).astype(cdt)
    v3 = v.reshape(TB, L, EP).astype(cdt)

    # Scores: contract last dims of both operands -- no explicit k.T / relayout.
    s = jnp.einsum("bld,bmd->blm", q3, k3,
                   preferred_element_type=jnp.float32)        # (TB, L, L)
    s = s - jnp.max(s, axis=-1, keepdims=True)
    p = jnp.exp(s)
    p = p * pl.reciprocal(jnp.sum(p, axis=-1, keepdims=True), approx=True)

    ctx = jnp.einsum("blm,bmd->bld", p.astype(cdt), v3,
                     preferred_element_type=jnp.float32)      # (TB, L, EP)
    attn = jnp.dot(ctx.reshape(TB * L, EP).astype(cdt), wo_ref[...],
                   preferred_element_type=jnp.float32) + bo

    # ---- residual + LayerNorm 1 ----
    y = layernorm(x2 + attn, g1, be1)

    # ---- feed-forward: Linear -> ReLU -> (Dropout) -> Linear -> (Dropout) ----
    h = jnp.dot(y.astype(cdt), w1_ref[...],
                preferred_element_type=jnp.float32) + b1
    h = jnp.maximum(h, 0.0)
    f = jnp.dot(h.astype(cdt), w2_ref[...],
                preferred_element_type=jnp.float32) + b2

    # ---- residual + LayerNorm 2 ----
    z = layernorm(y + f, g2, be2)
    o_ref[...] = z.reshape(TB, L, EP).astype(o_ref.dtype)


def mini_transformer_block(x, params, *, block_b=None, use_bf16=True):
    B, L, E = x.shape
    FF = params["w1"].shape[1]
    EP = _round_up(E, 128)                 # lane-dense padded embed width
    FP = _round_up(FF, 128)                # lane-dense padded FF width
    W = max(EP, FP)

    TB = block_b if block_b is not None else _pick_block_b(B)
    assert B % TB == 0, "batch must be divisible by the batch block"

    mm_dtype = jnp.bfloat16 if use_bf16 else jnp.float32

    def pad2(a, r, c):
        return jnp.pad(a, ((0, r - a.shape[0]), (0, c - a.shape[1])))

    # Zero-pad activations and parameters; padded rows/cols stay exactly zero
    # through the whole forward pass (LayerNorm masks its statistics).
    xp = jnp.pad(x.astype(jnp.float32), ((0, 0), (0, 0), (0, EP - E)))

    wqkv = jnp.concatenate(
        [pad2(params["wq"], EP, EP),
         pad2(params["wk"], EP, EP),
         pad2(params["wv"], EP, EP)], axis=1).astype(mm_dtype)   # (EP, 3EP)
    wo = pad2(params["wo"], EP, EP).astype(mm_dtype)
    w1 = pad2(params["w1"], EP, FP).astype(mm_dtype)
    w2 = pad2(params["w2"], FP, EP).astype(mm_dtype)

    vec_rows = [params[k] for k in
                ("bq", "bk", "bv", "bo", "g1", "be1", "b1", "b2", "g2", "be2")]
    vecs = jnp.concatenate([pad2(v, 1, W) for v in vec_rows], axis=0)  # (10, W) f32

    kernel = functools.partial(mini_transformer_kernel, e_real=E)

    def full_spec(a):
        return pl.BlockSpec(a.shape, lambda b: (0,) * a.ndim)

    out = pl.pallas_call(
        kernel,
        out_shape=jax.ShapeDtypeStruct((B, L, EP), jnp.float32),
        grid_spec=pltpu.PrefetchScalarGridSpec(
            num_scalar_prefetch=0,
            grid=(B // TB,),
            in_specs=[pl.BlockSpec((TB, L, EP), lambda b: (b, 0, 0)),
                      full_spec(wqkv), full_spec(wo),
                      full_spec(w1), full_spec(w2), full_spec(vecs)],
            out_specs=pl.BlockSpec((TB, L, EP), lambda b: (b, 0, 0)),
        ),
        compiler_params=pltpu.CompilerParams(
            dimension_semantics=("parallel",),
            vmem_limit_bytes=48 * 1024 * 1024,
        ),
    )(xp, wqkv, wo, w1, w2, vecs)

    return out[:, :, :E]


def make_params(key, embed_dim, ff_hidden_dim):
    """Weights stored already transposed so the kernel computes x @ W + b
    (PyTorch nn.Linear stores (out, in) and computes x @ W.T + b)."""
    E, FF = embed_dim, ff_hidden_dim
    ks = jax.random.split(key, 14)
    s = 0.1
    n = lambda k, shape: s * jax.random.normal(k, shape, jnp.float32)
    return {
        "wq": n(ks[0], (E, E)), "wk": n(ks[1], (E, E)), "wv": n(ks[2], (E, E)),
        "bq": n(ks[3], (1, E)), "bk": n(ks[4], (1, E)), "bv": n(ks[5], (1, E)),
        "wo": n(ks[6], (E, E)), "bo": n(ks[7], (1, E)),
        "g1": 1.0 + n(ks[8], (1, E)), "be1": n(ks[9], (1, E)),
        "w1": n(ks[10], (E, FF)), "b1": n(ks[11], (1, FF)),
        "w2": n(ks[12], (FF, E)), "b2": n(ks[13], (1, E)),
        "g2": jnp.ones((1, E), jnp.float32),
        "be2": jnp.zeros((1, E), jnp.float32),
    }


def reference(x, p):
    """Pure-JAX reference mirroring the PyTorch MiniTransformerBlock (eval mode)."""
    E = x.shape[-1]
    q = x @ p["wq"] + p["bq"]
    k = x @ p["wk"] + p["bk"]
    v = x @ p["wv"] + p["bv"]
    s = jnp.einsum("bld,bmd->blm", q, k) / jnp.sqrt(jnp.float32(E))
    a = jax.nn.softmax(s, axis=-1)
    attn = jnp.einsum("blm,bmd->bld", a, v) @ p["wo"] + p["bo"]

    def ln(h, g, b):
        mu = jnp.mean(h, -1, keepdims=True)
        var = jnp.mean((h - mu) ** 2, -1, keepdims=True)
        return (h - mu) * jax.lax.rsqrt(var + 1e-5) * g + b

    y = ln(x + attn, p["g1"], p["be1"])
    f = jnp.maximum(y @ p["w1"] + p["b1"], 0.0) @ p["w2"] + p["b2"]
    return ln(y + f, p["g2"], p["be2"])


if __name__ == "__main__":
    # backbone_dim = 2 * gru_hidden_dim = 32 in ProteinStructureModel; ff_hidden_dim=32.
    B, L, E, FF = 4, 8, 32, 32
    key = jax.random.PRNGKey(0)
    k_x, k_p = jax.random.split(key)

    x = jax.random.normal(k_x, (B, L, E), jnp.float32)
    params = make_params(k_p, E, FF)

    ref = reference(x, params)

    # f32 matmul path (tight check; only approximation is the EUP reciprocal).
    out_f32 = jax.block_until_ready(mini_transformer_block(x, params, use_bf16=False))
    assert out_f32.shape == (B, L, E)
    assert jnp.allclose(out_f32, ref, atol=5e-3, rtol=5e-3), (
        "f32 kernel mismatch, max abs err %g"
        % float(jnp.max(jnp.abs(out_f32 - ref))))

    # bf16 matmul path with f32 accumulation (looser tolerance, per review note).
    out_bf16 = jax.block_until_ready(mini_transformer_block(x, params, use_bf16=True))
    assert out_bf16.shape == (B, L, E)
    assert jnp.allclose(out_bf16, ref, atol=8e-2, rtol=8e-2), (
        "bf16 kernel mismatch, max abs err %g"
        % float(jnp.max(jnp.abs(out_bf16 - ref))))

    print("KERNEL_OK")
</pallas_src>

<mosaic_0001>
module attributes {stable_mosaic.version = 11 : i64} {
  func.func @mini_transformer_kernel(%arg0: i32, %arg1: memref<2x8x128xf32, #tpu.memory_space<vmem>>, %arg2: memref<128x384xf32, #tpu.memory_space<vmem>>, %arg3: memref<128x128xf32, #tpu.memory_space<vmem>>, %arg4: memref<128x128xf32, #tpu.memory_space<vmem>>, %arg5: memref<128x128xf32, #tpu.memory_space<vmem>>, %arg6: memref<10x128xf32, #tpu.memory_space<vmem>>, %arg7: memref<2x8x128xf32, #tpu.memory_space<vmem>>) attributes {dimension_semantics = [#tpu.dimension_semantics<parallel>], iteration_bounds = array<i64: 2>, scalar_prefetch = 0 : i64, scratch_operands = 0 : i64, tpu.core_type = #tpu.core_type<tc>, window_params = [{transform_indices = @transform_0, window_bounds = array<i64: 2, 8, 128>}, {pipeline_mode = #tpu.pipeline_mode<synchronous>, transform_indices = @transform_1, window_bounds = array<i64: 128, 384>}, {pipeline_mode = #tpu.pipeline_mode<synchronous>, transform_indices = @transform_2, window_bounds = array<i64: 128, 128>}, {pipeline_mode = #tpu.pipeline_mode<synchronous>, transform_indices = @transform_3, window_bounds = array<i64: 128, 128>}, {pipeline_mode = #tpu.pipeline_mode<synchronous>, transform_indices = @transform_4, window_bounds = array<i64: 128, 128>}, {pipeline_mode = #tpu.pipeline_mode<synchronous>, transform_indices = @transform_5, window_bounds = array<i64: 10, 128>}, {transform_indices = @transform_6, window_bounds = array<i64: 2, 8, 128>}]} {
    %c0 = arith.constant 0 : index
    %c0_0 = arith.constant 0 : index
    %c0_1 = arith.constant 0 : index
    %0 = vector.load %arg1[%c0, %c0_0, %c0_1] : memref<2x8x128xf32, #tpu.memory_space<vmem>>, vector<2x8x128xf32>
    %1 = vector.shape_cast %0 : vector<2x8x128xf32> to vector<16x128xf32>
    %c0_2 = arith.constant 0 : index
    %c0_3 = arith.constant 0 : index
    %2 = vector.load %arg6[%c0_2, %c0_3] : memref<10x128xf32, #tpu.memory_space<vmem>>, vector<10x128xf32>
    %3 = vector.extract_strided_slice %2 {offsets = [0, 0], sizes = [1, 128], strides = [1, 1]} : vector<10x128xf32> to vector<1x128xf32>
    %4 = vector.extract_strided_slice %2 {offsets = [1, 0], sizes = [1, 128], strides = [1, 1]} : vector<10x128xf32> to vector<1x128xf32>
    %5 = vector.extract_strided_slice %2 {offsets = [2, 0], sizes = [1, 128], strides = [1, 1]} : vector<10x128xf32> to vector<1x128xf32>
    %6 = vector.extract_strided_slice %2 {offsets = [3, 0], sizes = [1, 128], strides = [1, 1]} : vector<10x128xf32> to vector<1x128xf32>
    %7 = vector.extract_strided_slice %2 {offsets = [4, 0], sizes = [1, 128], strides = [1, 1]} : vector<10x128xf32> to vector<1x128xf32>
    %8 = vector.extract_strided_slice %2 {offsets = [5, 0], sizes = [1, 128], strides = [1, 1]} : vector<10x128xf32> to vector<1x128xf32>
    %9 = vector.extract_strided_slice %2 {offsets = [6, 0], sizes = [1, 128], strides = [1, 1]} : vector<10x128xf32> to vector<1x128xf32>
    %10 = vector.extract_strided_slice %2 {offsets = [7, 0], sizes = [1, 128], strides = [1, 1]} : vector<10x128xf32> to vector<1x128xf32>
    %11 = vector.extract_strided_slice %2 {offsets = [8, 0], sizes = [1, 128], strides = [1, 1]} : vector<10x128xf32> to vector<1x128xf32>
    %12 = vector.extract_strided_slice %2 {offsets = [9, 0], sizes = [1, 128], strides = [1, 1]} : vector<10x128xf32> to vector<1x128xf32>
    %13 = tpu.iota {dimensions = array<i32: 1>} : vector<1x128xi32>
    %c32_i32 = arith.constant 32 : i32
    %14 = vector.broadcast %c32_i32 : i32 to vector<1x128xi32>
    %15 = arith.cmpi slt, %13, %14 : vector<1x128xi32>
    %16 = arith.extui %15 : vector<1x128xi1> to vector<1x128xi32>
    %17 = arith.sitofp %16 : vector<1x128xi32> to vector<1x128xf32>
    %c0_4 = arith.constant 0 : index
    %c0_5 = arith.constant 0 : index
    %18 = vector.load %arg2[%c0_4, %c0_5] : memref<128x384xf32, #tpu.memory_space<vmem>>, vector<128x384xf32>
    %cst = arith.constant dense<0.000000e+00> : vector<16x384xf32>
    %19 = tpu.matmul %1, %18, %cst {dimension_numbers = #tpu.dot_dimension_numbers<[1], [0], [0], [1], [0, 0, 1, 1], [], []>} : vector<16x128xf32>, vector<128x384xf32>, vector<16x384xf32> -> vector<16x384xf32>
    %20 = vector.extract_strided_slice %19 {offsets = [0, 0], sizes = [16, 128], strides = [1, 1]} : vector<16x384xf32> to vector<16x128xf32>
    %21 = vector.broadcast %3 : vector<1x128xf32> to vector<16x128xf32>
    %22 = arith.addf %20, %21 : vector<16x128xf32>
    %cst_6 = arith.constant 0.176776692 : f32
    %23 = vector.broadcast %cst_6 : f32 to vector<16x128xf32>
    %24 = arith.mulf %22, %23 : vector<16x128xf32>
    %25 = vector.extract_strided_slice %19 {offsets = [0, 128], sizes = [16, 128], strides = [1, 1]} : vector<16x384xf32> to vector<16x128xf32>
    %26 = vector.broadcast %4 : vector<1x128xf32> to vector<16x128xf32>
    %27 = arith.addf %25, %26 : vector<16x128xf32>
    %28 = vector.extract_strided_slice %19 {offsets = [0, 256], sizes = [16, 128], strides = [1, 1]} : vector<16x384xf32> to vector<16x128xf32>
    %29 = vector.broadcast %5 : vector<1x128xf32> to vector<16x128xf32>
    %30 = arith.addf %28, %29 : vector<16x128xf32>
    %31 = vector.shape_cast %24 : vector<16x128xf32> to vector<2x8x128xf32>
    %32 = vector.shape_cast %27 : vector<16x128xf32> to vector<2x8x128xf32>
    %33 = vector.shape_cast %30 : vector<16x128xf32> to vector<2x8x128xf32>
    "tpu.trace_start"() <{level = 10 : i32, message = "bld,bmd->blm"}> : () -> ()
    %cst_7 = arith.constant dense<0.000000e+00> : vector<2x8x8xf32>
    %34 = tpu.matmul %31, %32, %cst_7 {dimension_numbers = #tpu.dot_dimension_numbers<[2], [2], [1], [1], [0, 0, 0, 1, 1, 1], [0], [0]>} : vector<2x8x128xf32>, vector<2x8x128xf32>, vector<2x8x8xf32> -> vector<2x8x8xf32>
    "tpu.trace_stop"() : () -> ()
    %cst_8 = arith.constant dense<0xFF800000> : vector<2x8xf32>
    %35 = vector.multi_reduction <maximumf>, %34, %cst_8 [2] : vector<2x8x8xf32> to vector<2x8xf32>
    %36 = vector.shape_cast %35 : vector<2x8xf32> to vector<2x8x1xf32>
    %37 = vector.broadcast %36 : vector<2x8x1xf32> to vector<2x8x8xf32>
    %38 = arith.subf %34, %37 : vector<2x8x8xf32>
    %39 = math.exp %38 : vector<2x8x8xf32>
    %cst_9 = arith.constant dense<0.000000e+00> : vector<2x8xf32>
    %40 = vector.multi_reduction <add>, %39, %cst_9 [2] : vector<2x8x8xf32> to vector<2x8xf32>
    %41 = vector.shape_cast %40 : vector<2x8xf32> to vector<2x8x1xf32>
    %42 = tpu.reciprocal %41 {approx = true} : vector<2x8x1xf32> -> vector<2x8x1xf32>
    %43 = vector.broadcast %42 : vector<2x8x1xf32> to vector<2x8x8xf32>
    %44 = arith.mulf %39, %43 : vector<2x8x8xf32>
    "tpu.trace_start"() <{level = 10 : i32, message = "blm,bmd->bld"}> : () -> ()
    %cst_10 = arith.constant dense<0.000000e+00> : vector<2x8x128xf32>
    %45 = tpu.matmul %44, %33, %cst_10 {dimension_numbers = #tpu.dot_dimension_numbers<[2], [1], [1], [2], [0, 0, 0, 1, 1, 2], [0], [0]>} : vector<2x8x8xf32>, vector<2x8x128xf32>, vector<2x8x128xf32> -> vector<2x8x128xf32>
    "tpu.trace_stop"() : () -> ()
    %46 = vector.shape_cast %45 : vector<2x8x128xf32> to vector<16x128xf32>
    %c0_11 = arith.constant 0 : index
    %c0_12 = arith.constant 0 : index
    %47 = vector.load %arg3[%c0_11, %c0_12] : memref<128x128xf32, #tpu.memory_space<vmem>>, vector<128x128xf32>
    %cst_13 = arith.constant dense<0.000000e+00> : vector<16x128xf32>
    %48 = tpu.matmul %46, %47, %cst_13 {dimension_numbers = #tpu.dot_dimension_numbers<[1], [0], [0], [1], [0, 0, 1, 1], [], []>} : vector<16x128xf32>, vector<128x128xf32>, vector<16x128xf32> -> vector<16x128xf32>
    %49 = vector.broadcast %6 : vector<1x128xf32> to vector<16x128xf32>
    %50 = arith.addf %48, %49 : vector<16x128xf32>
    %51 = arith.addf %1, %50 : vector<16x128xf32>
    %cst_14 = arith.constant dense<0.000000e+00> : vector<16xf32>
    %52 = vector.multi_reduction <add>, %51, %cst_14 [1] : vector<16x128xf32> to vector<16xf32>
    %53 = vector.shape_cast %52 : vector<16xf32> to vector<16x1xf32>
    %cst_15 = arith.constant 3.125000e-02 : f32
    %54 = vector.broadcast %cst_15 : f32 to vector<16x1xf32>
    %55 = arith.mulf %53, %54 : vector<16x1xf32>
    %56 = vector.broadcast %55 : vector<16x1xf32> to vector<16x128xf32>
    %57 = arith.subf %51, %56 : vector<16x128xf32>
    %58 = vector.broadcast %17 : vector<1x128xf32> to vector<16x128xf32>
    %59 = arith.mulf %57, %58 : vector<16x128xf32>
    %60 = arith.mulf %59, %59 : vector<16x128xf32>
    %cst_16 = arith.constant dense<0.000000e+00> : vector<16xf32>
    %61 = vector.multi_reduction <add>, %60, %cst_16 [1] : vector<16x128xf32> to vector<16xf32>
    %62 = vector.shape_cast %61 : vector<16xf32> to vector<16x1xf32>
    %cst_17 = arith.constant 3.125000e-02 : f32
    %63 = vector.broadcast %cst_17 : f32 to vector<16x1xf32>
    %64 = arith.mulf %62, %63 : vector<16x1xf32>
    %cst_18 = arith.constant 9.99999974E-6 : f32
    %65 = vector.broadcast %cst_18 : f32 to vector<16x1xf32>
    %66 = arith.addf %64, %65 : vector<16x1xf32>
    %67 = math.rsqrt %66 : vector<16x1xf32>
    %68 = vector.broadcast %67 : vector<16x1xf32> to vector<16x128xf32>
    %69 = arith.mulf %59, %68 : vector<16x128xf32>
    %70 = vector.broadcast %7 : vector<1x128xf32> to vector<16x128xf32>
    %71 = arith.mulf %69, %70 : vector<16x128xf32>
    %72 = vector.broadcast %8 : vector<1x128xf32> to vector<16x128xf32>
    %73 = arith.addf %71, %72 : vector<16x128xf32>
    %c0_19 = arith.constant 0 : index
    %c0_20 = arith.constant 0 : index
    %74 = vector.load %arg4[%c0_19, %c0_20] : memref<128x128xf32, #tpu.memory_space<vmem>>, vector<128x128xf32>
    %cst_21 = arith.constant dense<0.000000e+00> : vector<16x128xf32>
    %75 = tpu.matmul %73, %74, %cst_21 {dimension_numbers = #tpu.dot_dimension_numbers<[1], [0], [0], [1], [0, 0, 1, 1], [], []>} : vector<16x128xf32>, vector<128x128xf32>, vector<16x128xf32> -> vector<16x128xf32>
    %76 = vector.broadcast %9 : vector<1x128xf32> to vector<16x128xf32>
    %77 = arith.addf %75, %76 : vector<16x128xf32>
    %cst_22 = arith.constant 0.000000e+00 : f32
    %78 = vector.broadcast %cst_22 : f32 to vector<16x128xf32>
    %79 = arith.maximumf %77, %78 : vector<16x128xf32>
    %c0_23 = arith.constant 0 : index
    %c0_24 = arith.constant 0 : index
    %80 = vector.load %arg5[%c0_23, %c0_24] : memref<128x128xf32, #tpu.memory_space<vmem>>, vector<128x128xf32>
    %cst_25 = arith.constant dense<0.000000e+00> : vector<16x128xf32>
    %81 = tpu.matmul %79, %80, %cst_25 {dimension_numbers = #tpu.dot_dimension_numbers<[1], [0], [0], [1], [0, 0, 1, 1], [], []>} : vector<16x128xf32>, vector<128x128xf32>, vector<16x128xf32> -> vector<16x128xf32>
    %82 = vector.broadcast %10 : vector<1x128xf32> to vector<16x128xf32>
    %83 = arith.addf %81, %82 : vector<16x128xf32>
    %84 = arith.addf %73, %83 : vector<16x128xf32>
    %cst_26 = arith.constant dense<0.000000e+00> : vector<16xf32>
    %85 = vector.multi_reduction <add>, %84, %cst_26 [1] : vector<16x128xf32> to vector<16xf32>
    %86 = vector.shape_cast %85 : vector<16xf32> to vector<16x1xf32>
    %cst_27 = arith.constant 3.125000e-02 : f32
    %87 = vector.broadcast %cst_27 : f32 to vector<16x1xf32>
    %88 = arith.mulf %86, %87 : vector<16x1xf32>
    %89 = vector.broadcast %88 : vector<16x1xf32> to vector<16x128xf32>
    %90 = arith.subf %84, %89 : vector<16x128xf32>
    %91 = vector.broadcast %17 : vector<1x128xf32> to vector<16x128xf32>
    %92 = arith.mulf %90, %91 : vector<16x128xf32>
    %93 = arith.mulf %92, %92 : vector<16x128xf32>
    %cst_28 = arith.constant dense<0.000000e+00> : vector<16xf32>
    %94 = vector.multi_reduction <add>, %93, %cst_28 [1] : vector<16x128xf32> to vector<16xf32>
    %95 = vector.shape_cast %94 : vector<16xf32> to vector<16x1xf32>
    %cst_29 = arith.constant 3.125000e-02 : f32
    %96 = vector.broadcast %cst_29 : f32 to vector<16x1xf32>
    %97 = arith.mulf %95, %96 : vector<16x1xf32>
    %cst_30 = arith.constant 9.99999974E-6 : f32
    %98 = vector.broadcast %cst_30 : f32 to vector<16x1xf32>
    %99 = arith.addf %97, %98 : vector<16x1xf32>
    %100 = math.rsqrt %99 : vector<16x1xf32>
    %101 = vector.broadcast %100 : vector<16x1xf32> to vector<16x128xf32>
    %102 = arith.mulf %92, %101 : vector<16x128xf32>
    %103 = vector.broadcast %11 : vector<1x128xf32> to vector<16x128xf32>
    %104 = arith.mulf %102, %103 : vector<16x128xf32>
    %105 = vector.broadcast %12 : vector<1x128xf32> to vector<16x128xf32>
    %106 = arith.addf %104, %105 : vector<16x128xf32>
    %107 = vector.shape_cast %106 : vector<16x128xf32> to vector<2x8x128xf32>
    %c0_31 = arith.constant 0 : index
    %c0_32 = arith.constant 0 : index
    %c0_33 = arith.constant 0 : index
    %108 = vector.load %arg7[%c0_31, %c0_32, %c0_33] : memref<2x8x128xf32, #tpu.memory_space<vmem>>, vector<2x8x128xf32>
    tpu.vector_store %arg7[%c0_31, %c0_32, %c0_33], %107 {strides = array<i32>} : memref<2x8x128xf32, #tpu.memory_space<vmem>>, vector<2x8x128xf32>,
    return
  }
  func.func @transform_0(%arg0: i32) -> (i32, i32, i32) {
    %c0_i32 = arith.constant 0 : i32
    %c0_i32_0 = arith.constant 0 : i32
    %c0_i32_1 = arith.constant 0 : i32
    return %arg0, %c0_i32, %c0_i32_0 : i32, i32, i32
  }
  func.func @transform_1(%arg0: i32) -> (i32, i32) {
    %c0_i32 = arith.constant 0 : i32
    %c0_i32_0 = arith.constant 0 : i32
    %c0_i32_1 = arith.constant 0 : i32
    return %c0_i32, %c0_i32_0 : i32, i32
  }
  func.func @transform_2(%arg0: i32) -> (i32, i32) {
    %c0_i32 = arith.constant 0 : i32
    %c0_i32_0 = arith.constant 0 : i32
    %c0_i32_1 = arith.constant 0 : i32
    return %c0_i32, %c0_i32_0 : i32, i32
  }
  func.func @transform_3(%arg0: i32) -> (i32, i32) {
    %c0_i32 = arith.constant 0 : i32
    %c0_i32_0 = arith.constant 0 : i32
    %c0_i32_1 = arith.constant 0 : i32
    return %c0_i32, %c0_i32_0 : i32, i32
  }
  func.func @transform_4(%arg0: i32) -> (i32, i32) {
    %c0_i32 = arith.constant 0 : i32
    %c0_i32_0 = arith.constant 0 : i32
    %c0_i32_1 = arith.constant 0 : i32
    return %c0_i32, %c0_i32_0 : i32, i32
  }
  func.func @transform_5(%arg0: i32) -> (i32, i32) {
    %c0_i32 = arith.constant 0 : i32
    %c0_i32_0 = arith.constant 0 : i32
    %c0_i32_1 = arith.constant 0 : i32
    return %c0_i32, %c0_i32_0 : i32, i32
  }
  func.func @transform_6(%arg0: i32) -> (i32, i32, i32) {
    %c0_i32 = arith.constant 0 : i32
    %c0_i32_0 = arith.constant 0 : i32
    %c0_i32_1 = arith.constant 0 : i32
    return %arg0, %c0_i32, %c0_i32_0 : i32, i32, i32
  }
}

</mosaic_0001>

<llo_original>
// kernel: tpu_custom_call.1
$region0: #{tpu_custom_call.1}
  #allocation0 [shape = 'u32[]', space=smem, size = 0x4, offset = 0x4, fixed_abs, tag = 'smem constant byte address 0x4 - core index']
  #allocation1 [shape = 'u32[144,128]{1,0:T(1,128)}', space=vmem, size = 0x12000, scoped, tag = 'internal scratch']
  %s0 = inlined_call_operand.hbm [shape: f32[4,8,128], index: 0, kind: input, shape index: {}]
  %s1 = inlined_call_operand.hbm [shape: f32[128,384], index: 1, kind: input, shape index: {}]
  %s2 = inlined_call_operand.hbm [shape: f32[128,128], index: 2, kind: input, shape index: {}]
  %s3 = inlined_call_operand.hbm [shape: f32[128,128], index: 3, kind: input, shape index: {}]
  %s4 = inlined_call_operand.hbm [shape: f32[128,128], index: 4, kind: input, shape index: {}]
  %s5 = inlined_call_operand.vmem [shape: f32[10,128], index: 5, kind: input, shape index: {}]
  %s6 = inlined_call_operand.hbm [shape: f32[4,8,128], index: 6, kind: output, shape index: {}]
  %s7 = sld [smem:[#allocation0]]
  $region77: #{tpu_custom_call.1} parent=0
    _
  %s9 = ssub.s32 1, %s7
  %s10 = scalar_select 0, %s9, %s7
  $region1: #{tpu_custom_call.1} parent=0
    #allocation2 [shape = 'u8[16384]{0}', space=vmem, size = 0x4000, scoped, tag = 'input window, operand 0']
    #allocation3 [shape = 's32[2]{0}', space=sflag, size = 0x8, scoped, tag = 'scoped memory for tpu_custom_call.1']
    #allocation4 [shape = 's32[2]{0}', space=sflag, size = 0x8, scoped, tag = 'scoped memory for tpu_custom_call.1']
    #allocation5 [shape = 'u8[196608]{0}', space=vmem, size = 0x30000, scoped, tag = 'input window, operand 1, single buffered']
    #allocation6 [shape = 's32[1]{0}', space=sflag, size = 0x4, scoped, tag = 'scoped memory for tpu_custom_call.1']
    #allocation7 [shape = 'u8[65536]{0}', space=vmem, size = 0x10000, scoped, tag = 'input window, operand 2, single buffered']
    #allocation8 [shape = 'u8[65536]{0}', space=vmem, size = 0x10000, scoped, tag = 'input window, operand 3, single buffered']
    #allocation9 [shape = 's32[1]{0}', space=sflag, size = 0x4, scoped, tag = 'scoped memory for tpu_custom_call.1']
    #allocation10 [shape = 'u8[65536]{0}', space=vmem, size = 0x10000, scoped, tag = 'input window, operand 4, single buffered']
    #allocation11 [shape = 'u8[16384]{0}', space=vmem, size = 0x4000, scoped, tag = 'output window, operand 0']
    %11 = vsyncpa [#allocation3], 0
    %s12 = scalar_lea.sflag [#allocation3], 1
    %13 = vsyncpa %s12, 0
    %14 = vsyncpa [#allocation6], 0
    %15 = vsyncpa [#allocation9], 0
    %16 = vsyncpa [#allocation4], 0
    %s17 = scalar_lea.sflag [#allocation4], 1
    %18 = vsyncpa %s17, 0
    loop: start=0, step=1, limit=4
    $region2: #{tpu_custom_call.1} parent=1 // loop_pre_header
      _
    $region3: #{tpu_custom_call.1} parent=1 // loop_header
      %s20 = sphi 0, %s24
      %p21 = scmp.ge.s32.totalorder %s20, 4
      %s30 = sphi 0, %s32
      %s33 = sphi 0, %s30
      %s34 = sphi 0, %s33
      %s50 = sphi 0, %s34
      %s54 = sphi 0, %s54
      %s56 = sphi 0, %s54
      %s57 = sphi 0, %s56
      %s71 = sphi 0, %s57
      %s75 = sphi 0, %s75
      %s77 = sphi 0, %s75
      %s78 = sphi 0, %s77
      %s92 = sphi 0, %s78
      %s96 = sphi 0, %s96
      %s98 = sphi 0, %s96
      %s99 = sphi 0, %s98
      %s113 = sphi 0, %s99
      %s117 = sphi 0, %s117
      %s119 = sphi 0, %s117
      %s120 = sphi 0, %s119
      %s134 = sphi 0, %s120
      %s138 = sphi 0, %s138
      %s140 = sphi 0, %s138
      %s141 = sphi 0, %s140
      %s155 = sphi 0, %s141
      %s161 = sphi 0, %s163
      %s164 = sphi 0, %s161
      %s165 = sphi 0, %s164
      %s181 = sphi 0, %s165
    $region4: #{tpu_custom_call.1} parent=1 // loop_header_branch
      %23 = sbr.rel (%p21) target = $region8
    $region5: #{tpu_custom_call.1} parent=1 // loop_body
      %s25 = ssub.s32 %s20, 1
      %s26 = ssub.s32 %s20, 2
      %s27 = sadd.s32 %s20, 1
      %s28 = ssub.s32 %s20, %s27
      %p29 = scmp.eq.s32.totalorder %s28, 0
      %s31 = sadd.s32 %s30, 1
      %s32 = scalar_select %p29, %s30, %s31
      %p35 = pneg %p29
      %p36 = scmp.eq.s32.totalorder %s20, 1
      %p37 = por %p35, %p36
      %p38 = scmp.ne.s32.totalorder %s30, %s33
      %p39 = scmp.eq.s32.totalorder %s20, 0
      %p40 = por %p38, %p39
      %p41 = scmp.ne.s32.totalorder %s30, %s33
      %p42 = scmp.eq.s32.totalorder %s25, 1
      %p43 = por %p41, %p42
      %p44 = scmp.ne.s32.totalorder %s33, %s34
      %p45 = scmp.eq.s32.totalorder %s25, 0
      %p46 = por %p44, %p45
      %p47 = scmp.ne.s32.totalorder %s33, %s34
      %p48 = scmp.eq.s32.totalorder %s26, 1
      %p49 = por %p47, %p48
      %p51 = scmp.ne.s32.totalorder %s34, %s50
      %p52 = scmp.eq.s32.totalorder %s26, 0
      %p53 = por %p51, %p52
      %s55 = sadd.s32 %s54, 1
      %p58 = scmp.eq.s32.totalorder %s20, 1
      %p59 = scmp.ne.s32.totalorder %s54, %s56
      %p60 = scmp.eq.s32.totalorder %s20, 0
      %p61 = por %p59, %p60
      %p62 = scmp.ne.s32.totalorder %s54, %s56
      %p63 = scmp.eq.s32.totalorder %s25, 1
      %p64 = por %p62, %p63
      %p65 = scmp.ne.s32.totalorder %s56, %s57
      %p66 = scmp.eq.s32.totalorder %s25, 0
      %p67 = por %p65, %p66
      %p68 = scmp.ne.s32.totalorder %s56, %s57
      %p69 = scmp.eq.s32.totalorder %s26, 1
      %p70 = por %p68, %p69
      %p72 = scmp.ne.s32.totalorder %s57, %s71
      %p73 = scmp.eq.s32.totalorder %s26, 0
      %p74 = por %p72, %p73
      %s76 = sadd.s32 %s75, 1
      %p79 = scmp.eq.s32.totalorder %s20, 1
      %p80 = scmp.ne.s32.totalorder %s75, %s77
      %p81 = scmp.eq.s32.totalorder %s20, 0
      %p82 = por %p80, %p81
      %p83 = scmp.ne.s32.totalorder %s75, %s77
      %p84 = scmp.eq.s32.totalorder %s25, 1
      %p85 = por %p83, %p84
      %p86 = scmp.ne.s32.totalorder %s77, %s78
      %p87 = scmp.eq.s32.totalorder %s25, 0
      %p88 = por %p86, %p87
      %p89 = scmp.ne.s32.totalorder %s77, %s78
      %p90 = scmp.eq.s32.totalorder %s26, 1
      %p91 = por %p89, %p90
      %p93 = scmp.ne.s32.totalorder %s78, %s92
      %p94 = scmp.eq.s32.totalorder %s26, 0
      %p95 = por %p93, %p94
      %s97 = sadd.s32 %s96, 1
      %p100 = scmp.eq.s32.totalorder %s20, 1
      %p101 = scmp.ne.s32.totalorder %s96, %s98
      %p102 = scmp.eq.s32.totalorder %s20, 0
      %p103 = por %p101, %p102
      %p104 = scmp.ne.s32.totalorder %s96, %s98
      %p105 = scmp.eq.s32.totalorder %s25, 1
      %p106 = por %p104, %p105
      %p107 = scmp.ne.s32.totalorder %s98, %s99
      %p108 = scmp.eq.s32.totalorder %s25, 0
      %p109 = por %p107, %p108
      %p110 = scmp.ne.s32.totalorder %s98, %s99
      %p111 = scmp.eq.s32.totalorder %s26, 1
      %p112 = por %p110, %p111
      %p114 = scmp.ne.s32.totalorder %s99, %s113
      %p115 = scmp.eq.s32.totalorder %s26, 0
      %p116 = por %p114, %p115
      %s118 = sadd.s32 %s117, 1
      %p121 = scmp.eq.s32.totalorder %s20, 1
      %p122 = scmp.ne.s32.totalorder %s117, %s119
      %p123 = scmp.eq.s32.totalorder %s20, 0
      %p124 = por %p122, %p123
      %p125 = scmp.ne.s32.totalorder %s117, %s119
      %p126 = scmp.eq.s32.totalorder %s25, 1
      %p127 = por %p125, %p126
      %p128 = scmp.ne.s32.totalorder %s119, %s120
      %p129 = scmp.eq.s32.totalorder %s25, 0
      %p130 = por %p128, %p129
      %p131 = scmp.ne.s32.totalorder %s119, %s120
      %p132 = scmp.eq.s32.totalorder %s26, 1
      %p133 = por %p131, %p132
      %p135 = scmp.ne.s32.totalorder %s120, %s134
      %p136 = scmp.eq.s32.totalorder %s26, 0
      %p137 = por %p135, %p136
      %s139 = sadd.s32 %s138, 1
      %p142 = scmp.eq.s32.totalorder %s20, 1
      %p143 = scmp.ne.s32.totalorder %s138, %s140
      %p144 = scmp.eq.s32.totalorder %s20, 0
      %p145 = por %p143, %p144
      %p146 = scmp.ne.s32.totalorder %s138, %s140
      %p147 = scmp.eq.s32.totalorder %s25, 1
      %p148 = por %p146, %p147
      %p149 = scmp.ne.s32.totalorder %s140, %s141
      %p150 = scmp.eq.s32.totalorder %s25, 0
      %p151 = por %p149, %p150
      %p152 = scmp.ne.s32.totalorder %s140, %s141
      %p153 = scmp.eq.s32.totalorder %s26, 1
      %p154 = por %p152, %p153
      %p156 = scmp.ne.s32.totalorder %s141, %s155
      %p157 = scmp.eq.s32.totalorder %s26, 0
      %p158 = por %p156, %p157
      %s159 = ssub.s32 %s20, %s27
      %p160 = scmp.eq.s32.totalorder %s159, 0
      %s162 = sadd.s32 %s161, 1
      %s163 = scalar_select %p160, %s161, %s162
      %p166 = pneg %p160
      %p167 = scmp.eq.s32.totalorder %s20, 1
      %p168 = por %p166, %p167
      %p169 = scmp.ne.s32.totalorder %s161, %s164
      %p170 = scmp.eq.s32.totalorder %s20, 0
      %p171 = por %p169, %p170
      %p172 = scmp.ne.s32.totalorder %s161, %s164
      %p173 = scmp.eq.s32.totalorder %s25, 1
      %p174 = por %p172, %p173
      %p175 = scmp.ne.s32.totalorder %s164, %s165
      %p176 = scmp.eq.s32.totalorder %s25, 0
      %p177 = por %p175, %p176
      %p178 = scmp.ne.s32.totalorder %s164, %s165
      %p179 = scmp.eq.s32.totalorder %s26, 1
      %p180 = por %p178, %p179
      %p182 = scmp.ne.s32.totalorder %s165, %s181
      %p183 = scmp.eq.s32.totalorder %s26, 0
      %p184 = por %p182, %p183
      %p185 = scmp.le.s32.totalorder 1, %s20
      %p186 = scmp.lt.s32.totalorder %s20, 3
      %p187 = pnand %p185, %p186
      %p188 = pneg %p187
      // Predicated region
      $region9: #{tpu_custom_call.1} parent=5 // pred_check
        _
      $region10: #{tpu_custom_call.1} parent=5 // pred_check_branch
        %190 = sbr.rel (%p187) target = $region12
      $region11: #{tpu_custom_call.1} parent=5 // pred_region
        %s191 = ssub.s32 %s20, 1
        // Predicated region
        $region13: #{tpu_custom_call.1} parent=11 // pred_check
          %p192 = pneg %p67
        $region14: #{tpu_custom_call.1} parent=11 // pred_check_branch
          %194 = sbr.rel (%p192) target = $region16
        $region15: #{tpu_custom_call.1} parent=11 // pred_region
          %s196 = ssub.s32 6144, 6144
          %197 = vsyncadd [#allocation6], %s196
          %s198 = sshll.u32 [#allocation5], 4
          %s199 = int_to_ptr.vmem [resolvable:$true] %s198
          %204 = dma.hbm_to_vmem [thread:$0]  %s1, 6144, %s199, [#allocation6], 384, 384, 24
        $region16: #{tpu_custom_call.1} parent=11 // pred_fallthru
          _
        // Predicated region
        $region17: #{tpu_custom_call.1} parent=11 // pred_check
          %p205 = pneg %p88
        $region18: #{tpu_custom_call.1} parent=11 // pred_check_branch
          %207 = sbr.rel (%p205) target = $region20
        $region19: #{tpu_custom_call.1} parent=11 // pred_region
          %s209 = ssub.s32 2048, 2048
          %210 = vsyncadd [#allocation6], %s209
          %s211 = sshll.u32 [#allocation7], 4
          %s212 = int_to_ptr.vmem [resolvable:$true] %s211
          %217 = dma.hbm_to_vmem [thread:$0]  %s2, 2048, %s212, [#allocation6], 128, 128, 8
        $region20: #{tpu_custom_call.1} parent=11 // pred_fallthru
          _
        // Predicated region
        $region21: #{tpu_custom_call.1} parent=11 // pred_check
          %p218 = pneg %p109
        $region22: #{tpu_custom_call.1} parent=11 // pred_check_branch
          %220 = sbr.rel (%p218) target = $region24
        $region23: #{tpu_custom_call.1} parent=11 // pred_region
          %s222 = ssub.s32 2048, 2048
          %223 = vsyncadd [#allocation9], %s222
          %s224 = sshll.u32 [#allocation8], 4
          %s225 = int_to_ptr.vmem [resolvable:$true] %s224
          %230 = dma.hbm_to_vmem [thread:$0]  %s3, 2048, %s225, [#allocation9], 128, 128, 8
        $region24: #{tpu_custom_call.1} parent=11 // pred_fallthru
          _
        // Predicated region
        $region25: #{tpu_custom_call.1} parent=11 // pred_check
          %p231 = pneg %p130
        $region26: #{tpu_custom_call.1} parent=11 // pred_check_branch
          %233 = sbr.rel (%p231) target = $region28
        $region27: #{tpu_custom_call.1} parent=11 // pred_region
          %s235 = ssub.s32 2048, 2048
          %236 = vsyncadd [#allocation9], %s235
          %s237 = sshll.u32 [#allocation10], 4
          %s238 = int_to_ptr.vmem [resolvable:$true] %s237
          %243 = dma.hbm_to_vmem [thread:$0]  %s4, 2048, %s238, [#allocation9], 128, 128, 8
        $region28: #{tpu_custom_call.1} parent=11 // pred_fallthru
          _
        // Predicated region
        $region29: #{tpu_custom_call.1} parent=11 // pred_check
          %p244 = pneg %p151
        $region30: #{tpu_custom_call.1} parent=11 // pred_check_branch
          %246 = sbr.rel (%p244) target = $region32
        $region31: #{tpu_custom_call.1} parent=11 // pred_region
          _
        $region32: #{tpu_custom_call.1} parent=11 // pred_fallthru
          _
      $region12: #{tpu_custom_call.1} parent=5 // pred_fallthru
        _
      %p247 = scmp.lt.s32.totalorder %s20, 2
      // Predicated region
      $region33: #{tpu_custom_call.1} parent=5 // pred_check
        %p248 = pneg %p247
      $region34: #{tpu_custom_call.1} parent=5 // pred_check_branch
        %250 = sbr.rel (%p248) target = $region36
      $region35: #{tpu_custom_call.1} parent=5 // pred_region
        // Predicated region
        $region37: #{tpu_custom_call.1} parent=35 // pred_check
          %p251 = pneg %p40
        $region38: #{tpu_custom_call.1} parent=35 // pred_check_branch
          %253 = sbr.rel (%p251) target = $region40
        $region39: #{tpu_custom_call.1} parent=35 // pred_region
          %s254 = sand.u32 %s30, 1
          %s255 = scalar_lea.sflag [#allocation3], %s254
          %s256 = sand.u32 %s30, 1
          %s257 = smul.addr %s256, 16
          %s258 = scalar_lea.vmem [#allocation2], %s257
          %s259 = smul.u32 2, %s20
          %s261 = ssub.s32 256, 256
          %262 = vsyncadd %s255, %s261
          %s263 = smul.addr %s259, 128
          %s264 = scalar_lea.hbm %s0, %s263
          %s265 = sshll.u32 %s258, 4
          %s266 = int_to_ptr.vmem [resolvable:$true] %s265
          %271 = dma.hbm_to_vmem [thread:$0]  %s264, 256, %s266, %s255, 128, 128, 8
        $region40: #{tpu_custom_call.1} parent=35 // pred_fallthru
          _
      $region36: #{tpu_custom_call.1} parent=5 // pred_fallthru
        _
      %p272 = scmp.le.s32.totalorder 1, %s20
      %p273 = scmp.lt.s32.totalorder %s20, 3
      %p274 = pnand %p272, %p273
      %p275 = pneg %p274
      // Predicated region
      $region41: #{tpu_custom_call.1} parent=5 // pred_check
        _
      $region42: #{tpu_custom_call.1} parent=5 // pred_check_branch
        %277 = sbr.rel (%p274) target = $region44
      $region43: #{tpu_custom_call.1} parent=5 // pred_region
        %s278 = ssub.s32 %s20, 1
        %s279 = sand.u32 %s33, 1
        %s280 = scalar_lea.sflag [#allocation3], %s279
        %s281 = sand.u32 %s33, 1
        %s282 = smul.addr %s281, 16
        %s283 = scalar_lea.vmem [#allocation2], %s282
        // Predicated region
        $region45: #{tpu_custom_call.1} parent=43 // pred_check
          %p284 = pneg %p46
        $region46: #{tpu_custom_call.1} parent=43 // pred_check_branch
          %286 = sbr.rel (%p284) target = $region48
        $region47: #{tpu_custom_call.1} parent=43 // pred_region
          %287 = dma.done %s280, 256
        $region48: #{tpu_custom_call.1} parent=43 // pred_fallthru
          _
        // Predicated region
        $region49: #{tpu_custom_call.1} parent=43 // pred_check
          %p288 = pneg %p67
        $region50: #{tpu_custom_call.1} parent=43 // pred_check_branch
          %290 = sbr.rel (%p288) target = $region52
        $region51: #{tpu_custom_call.1} parent=43 // pred_region
          %291 = dma.done [#allocation6], 6144
        $region52: #{tpu_custom_call.1} parent=43 // pred_fallthru
          _
        // Predicated region
        $region53: #{tpu_custom_call.1} parent=43 // pred_check
          %p292 = pneg %p88
        $region54: #{tpu_custom_call.1} parent=43 // pred_check_branch
          %294 = sbr.rel (%p292) target = $region56
        $region55: #{tpu_custom_call.1} parent=43 // pred_region
          %295 = dma.done [#allocation6], 2048
        $region56: #{tpu_custom_call.1} parent=43 // pred_fallthru
          _
        // Predicated region
        $region57: #{tpu_custom_call.1} parent=43 // pred_check
          %p296 = pneg %p109
        $region58: #{tpu_custom_call.1} parent=43 // pred_check_branch
          %298 = sbr.rel (%p296) target = $region60
        $region59: #{tpu_custom_call.1} parent=43 // pred_region
          %299 = dma.done [#allocation9], 2048
        $region60: #{tpu_custom_call.1} parent=43 // pred_fallthru
          _
        // Predicated region
        $region61: #{tpu_custom_call.1} parent=43 // pred_check
          %p300 = pneg %p130
        $region62: #{tpu_custom_call.1} parent=43 // pred_check_branch
          %302 = sbr.rel (%p300) target = $region64
        $region63: #{tpu_custom_call.1} parent=43 // pred_region
          %303 = dma.done [#allocation9], 2048
        $region64: #{tpu_custom_call.1} parent=43 // pred_fallthru
          _
        %s304 = sand.u32 %s33, 1
        %s305 = scalar_lea.sflag [#allocation3], %s304
        %s306 = sand.u32 %s33, 1
        %s307 = smul.addr %s306, 16
        %s308 = scalar_lea.vmem [#allocation2], %s307
        %p309 = pneg %p46
        %p310 = pneg %p43
        %p311 = pneg %p67
        %p312 = pneg %p64
        %p313 = pneg %p88
        %p314 = pneg %p85
        %p315 = pneg %p109
        %p316 = pneg %p106
        %p317 = pneg %p130
        %p318 = pneg %p127
        %p319 = pneg %p151
        %p320 = pneg %p148
        %p321 = pneg %p177
        %p322 = pneg %p174
        %s323 = sand.u32 %s164, 1
        %s324 = scalar_lea.sflag [#allocation4], %s323
        %s325 = sand.u32 %s164, 1
        %s326 = smul.addr %s325, 16
        %s327 = scalar_lea.vmem [#allocation11], %s326
        %s328 = smul.u32 2, %s25
        %s329 = smul.u32 2, %s25
        %v330 = vld [vmem:[%s283] sm:$0xff]
        %v331 = vld [vmem:[%s283 + $0x8] sm:$0xff]
        %v332 = vld [vmem:[%s5] sm:$0xff]
        %v333 = vld [vmem:[%s5 + $0x8] sm:$0x3]
        %v334 = vlaneseq
        %v335 = vand.u32 %v334, 127
        %vm336 = vcmp.lt.s32.totalorder %v335, 32
        %v337 = vsel %vm336, 1, 0
        %v338 = vcvt.s32.f32 %v337
        %v339 = vld [vmem:[#allocation5] sm:$0xff]
        %v340 = vld [vmem:[#allocation5 + $0x8] sm:$0xff]
        %v341 = vld [vmem:[#allocation5 + $0x10] sm:$0xff]
        %v342 = vld [vmem:[#allocation5 + $0x18] sm:$0xff]
        %v343 = vld [vmem:[#allocation5 + $0x20] sm:$0xff]
        %v344 = vld [vmem:[#allocation5 + $0x28] sm:$0xff]
        %v345 = vld [vmem:[#allocation5 + $0x30] sm:$0xff]
        %v346 = vld [vmem:[#allocation5 + $0x38] sm:$0xff]
        %v347 = vld [vmem:[#allocation5 + $0x40] sm:$0xff]
        %v348 = vld [vmem:[#allocation5 + $0x48] sm:$0xff]
        %v349 = vld [vmem:[#allocation5 + $0x50] sm:$0xff]
        %v350 = vld [vmem:[#allocation5 + $0x58] sm:$0xff]
        %v351 = vld [vmem:[#allocation5 + $0x60] sm:$0xff]
        %v352 = vld [vmem:[#allocation5 + $0x68] sm:$0xff]
        %v353 = vld [vmem:[#allocation5 + $0x70] sm:$0xff]
        %v354 = vld [vmem:[#allocation5 + $0x78] sm:$0xff]
        %v355 = vld [vmem:[#allocation5 + $0x80] sm:$0xff]
        %v356 = vld [vmem:[#allocation5 + $0x88] sm:$0xff]
        %v357 = vld [vmem:[#allocation5 + $0x90] sm:$0xff]
        %v358 = vld [vmem:[#allocation5 + $0x98] sm:$0xff]
        %v359 = vld [vmem:[#allocation5 + $0xa0] sm:$0xff]
        %v360 = vld [vmem:[#allocation5 + $0xa8] sm:$0xff]
        %v361 = vld [vmem:[#allocation5 + $0xb0] sm:$0xff]
        %v362 = vld [vmem:[#allocation5 + $0xb8] sm:$0xff]
        %v363 = vld [vmem:[#allocation5 + $0xc0] sm:$0xff]
        %v364 = vld [vmem:[#allocation5 + $0xc8] sm:$0xff]
        %v365 = vld [vmem:[#allocation5 + $0xd0] sm:$0xff]
        %v366 = vld [vmem:[#allocation5 + $0xd8] sm:$0xff]
        %v367 = vld [vmem:[#allocation5 + $0xe0] sm:$0xff]
        %v368 = vld [vmem:[#allocation5 + $0xe8] sm:$0xff]
        %v369 = vld [vmem:[#allocation5 + $0xf0] sm:$0xff]
        %v370 = vld [vmem:[#allocation5 + $0xf8] sm:$0xff]
        %v371 = vld [vmem:[#allocation5 + $0x100] sm:$0xff]
        %v372 = vld [vmem:[#allocation5 + $0x108] sm:$0xff]
        %v373 = vld [vmem:[#allocation5 + $0x110] sm:$0xff]
        %v374 = vld [vmem:[#allocation5 + $0x118] sm:$0xff]
        %v375 = vld [vmem:[#allocation5 + $0x120] sm:$0xff]
        %v376 = vld [vmem:[#allocation5 + $0x128] sm:$0xff]
        %v377 = vld [vmem:[#allocation5 + $0x130] sm:$0xff]
        %v378 = vld [vmem:[#allocation5 + $0x138] sm:$0xff]
        %v379 = vld [vmem:[#allocation5 + $0x140] sm:$0xff]
        %v380 = vld [vmem:[#allocation5 + $0x148] sm:$0xff]
        %v381 = vld [vmem:[#allocation5 + $0x150] sm:$0xff]
        %v382 = vld [vmem:[#allocation5 + $0x158] sm:$0xff]
        %v383 = vld [vmem:[#allocation5 + $0x160] sm:$0xff]
        %v384 = vld [vmem:[#allocation5 + $0x168] sm:$0xff]
        %v385 = vld [vmem:[#allocation5 + $0x170] sm:$0xff]
        %v386 = vld [vmem:[#allocation5 + $0x178] sm:$0xff]
        %387 = vmatprep.subr.mxu0 %v340
        %388 = vmatpush1.msra.mxu0 %v339
        %389 = vmatprep.subr.mxu0 %v343
        %390 = vmatpush1.msra.mxu0 %v342
        %391 = vmatprep.subr.mxu0 %v346
        %392 = vmatpush1.msra.mxu0 %v345
        %393 = vmatprep.subr.mxu0 %v349
        %394 = vmatpush1.msra.mxu0 %v348
        %395 = vmatprep.subr.mxu0 %v352
        %396 = vmatpush1.msra.mxu0 %v351
        %397 = vmatprep.subr.mxu0 %v355
        %398 = vmatpush1.msra.mxu0 %v354
        %399 = vmatprep.subr.mxu0 %v358
        %400 = vmatpush1.msra.mxu0 %v357
        %401 = vmatprep.subr.mxu0 %v361
        %402 = vmatpush1.msra.mxu0 %v360
        %403 = vmatprep.subr.mxu0 %v364
        %404 = vmatpush1.msra.mxu0 %v363
        %405 = vmatprep.subr.mxu0 %v367
        %406 = vmatpush1.msra.mxu0 %v366
        %407 = vmatprep.subr.mxu0 %v370
        %408 = vmatpush1.msra.mxu0 %v369
        %409 = vmatprep.subr.mxu0 %v373
        %410 = vmatpush1.msra.mxu0 %v372
        %411 = vmatprep.subr.mxu0 %v376
        %412 = vmatpush1.msra.mxu0 %v375
        %413 = vmatprep.subr.mxu0 %v379
        %414 = vmatpush1.msra.mxu0 %v378
        %415 = vmatprep.subr.mxu0 %v382
        %416 = vmatpush1.msra.mxu0 %v381
        %417 = vmatprep.subr.mxu0 %v385
        %418 = vmatpush1.msra.mxu0 %v384
        %419 = vmatprep.subr.mxu0 0.0
        %420 = vmatpush1.msra.mxu0 0.0
        %421 = vmatprep.subr.mxu0 0.0
        %422 = vmatpush1.msra.mxu0 0.0
        %423 = vmatprep.subr.mxu0 0.0
        %424 = vmatpush1.msra.mxu0 0.0
        %425 = vmatprep.subr.mxu0 0.0
        %426 = vmatpush1.msra.mxu0 0.0
        %427 = vmatprep.subr.mxu0 0.0
        %428 = vmatpush1.msra.mxu0 0.0
        %429 = vmatprep.subr.mxu0 0.0
        %430 = vmatpush1.msra.mxu0 0.0
        %431 = vmatprep.subr.mxu0 0.0
        %432 = vmatpush1.msra.mxu0 0.0
        %433 = vmatprep.subr.mxu0 0.0
        %434 = vmatpush1.msra.mxu0 0.0
        %435 = vmatprep.subr.mxu0 0.0
        %436 = vmatpush1.msra.mxu0 0.0
        %437 = vmatprep.subr.mxu0 0.0
        %438 = vmatpush1.msra.mxu0 0.0
        %439 = vmatprep.subr.mxu0 0.0
        %440 = vmatpush1.msra.mxu0 0.0
        %441 = vmatprep.subr.mxu0 0.0
        %442 = vmatpush1.msra.mxu0 0.0
        %443 = vmatprep.subr.mxu0 0.0
        %444 = vmatpush1.msra.mxu0 0.0
        %445 = vmatprep.subr.mxu0 0.0
        %446 = vmatpush1.msra.mxu0 0.0
        %447 = vmatprep.subr.mxu0 0.0
        %448 = vmatpush1.msra.mxu0 0.0
        %449 = vmatprep.subr.mxu0 0.0
        %450 = vmatpush1.msra.mxu0 0.0
        %451 = vmatprep.mubr.f32.mxu0 0.0
        %452 = vmatmul.mubr.f32.gmra.mrb[0].mxu0 %v330
        %v453 = vpop.f32.mrb[0].mxu0
        %v454 = vadd.f32 0.0, %v453
        %v455 = vpop.f32.mrb[0].mxu0
        %v456 = vadd.f32 0.0, %v455
        %457 = vmatprep.mubr.f32.mxu0 0.0
        %458 = vmatmul.mubr.f32.gmra.mrb[0].mxu0 %v331
        %v459 = vpop.f32.mrb[0].mxu0
        %v460 = vadd.f32 0.0, %v459
        %v461 = vpop.f32.mrb[0].mxu0
        %v462 = vadd.f32 0.0, %v461
        %463 = vdwg.mxu0
        %464 = vmatprep.subr.mxu0 0.0
        %465 = vmatpush1.msra.mxu0 %v341
        %466 = vmatprep.subr.mxu0 0.0
        %467 = vmatpush1.msra.mxu0 %v344
        %468 = vmatprep.subr.mxu0 0.0
        %469 = vmatpush1.msra.mxu0 %v347
        %470 = vmatprep.subr.mxu0 0.0
        %471 = vmatpush1.msra.mxu0 %v350
        %472 = vmatprep.subr.mxu0 0.0
        %473 = vmatpush1.msra.mxu0 %v353
        %474 = vmatprep.subr.mxu0 0.0
        %475 = vmatpush1.msra.mxu0 %v356
        %476 = vmatprep.subr.mxu0 0.0
        %477 = vmatpush1.msra.mxu0 %v359
        %478 = vmatprep.subr.mxu0 0.0
        %479 = vmatpush1.msra.mxu0 %v362
        %480 = vmatprep.subr.mxu0 0.0
        %481 = vmatpush1.msra.mxu0 %v365
        %482 = vmatprep.subr.mxu0 0.0
        %483 = vmatpush1.msra.mxu0 %v368
        %484 = vmatprep.subr.mxu0 0.0
        %485 = vmatpush1.msra.mxu0 %v371
        %486 = vmatprep.subr.mxu0 0.0
        %487 = vmatpush1.msra.mxu0 %v374
        %488 = vmatprep.subr.mxu0 0.0
        %489 = vmatpush1.msra.mxu0 %v377
        %490 = vmatprep.subr.mxu0 0.0
        %491 = vmatpush1.msra.mxu0 %v380
        %492 = vmatprep.subr.mxu0 0.0
        %493 = vmatpush1.msra.mxu0 %v383
        %494 = vmatprep.subr.mxu0 0.0
        %495 = vmatpush1.msra.mxu0 %v386
        %496 = vmatprep.subr.mxu0 0.0
        %497 = vmatpush1.msra.mxu0 0.0
        %498 = vmatprep.subr.mxu0 0.0
        %499 = vmatpush1.msra.mxu0 0.0
        %500 = vmatprep.subr.mxu0 0.0
        %501 = vmatpush1.msra.mxu0 0.0
        %502 = vmatprep.subr.mxu0 0.0
        %503 = vmatpush1.msra.mxu0 0.0
        %504 = vmatprep.subr.mxu0 0.0
        %505 = vmatpush1.msra.mxu0 0.0
        %506 = vmatprep.subr.mxu0 0.0
        %507 = vmatpush1.msra.mxu0 0.0
        %508 = vmatprep.subr.mxu0 0.0
        %509 = vmatpush1.msra.mxu0 0.0
        %510 = vmatprep.subr.mxu0 0.0
        %511 = vmatpush1.msra.mxu0 0.0
        %512 = vmatprep.subr.mxu0 0.0
        %513 = vmatpush1.msra.mxu0 0.0
        %514 = vmatprep.subr.mxu0 0.0
        %515 = vmatpush1.msra.mxu0 0.0
        %516 = vmatprep.subr.mxu0 0.0
        %517 = vmatpush1.msra.mxu0 0.0
        %518 = vmatprep.subr.mxu0 0.0
        %519 = vmatpush1.msra.mxu0 0.0
        %520 = vmatprep.subr.mxu0 0.0
        %521 = vmatpush1.msra.mxu0 0.0
        %522 = vmatprep.subr.mxu0 0.0
        %523 = vmatpush1.msra.mxu0 0.0
        %524 = vmatprep.subr.mxu0 0.0
        %525 = vmatpush1.msra.mxu0 0.0
        %526 = vmatprep.subr.mxu0 0.0
        %527 = vmatpush1.msra.mxu0 0.0
        %528 = vmatprep.mubr.f32.mxu0 0.0
        %529 = vmatmul.mubr.f32.gmra.mrb[0].mxu0 %v330
        %v530 = vpop.f32.mrb[0].mxu0
        %v531 = vadd.f32 0.0, %v530
        %v532 = vpop.f32.mrb[0].mxu0
        %533 = vmatprep.mubr.f32.mxu0 0.0
        %534 = vmatmul.mubr.f32.gmra.mrb[0].mxu0 %v331
        %v535 = vpop.f32.mrb[0].mxu0
        %v536 = vadd.f32 0.0, %v535
        %v537 = vpop.f32.mrb[0].mxu0
        %538 = vdwg.mxu0
        %v539 = vlaneseq
        %v540 = vshrl.u32 %v539, 7
        %v541 = vsub.s32 0, %v540
        %v542 = vrot.slane %v332, %v541
        %v543 = vadd.f32 %v454, %v542
        %v544 = vadd.f32 %v460, %v542
        %v545 = vmul.f32 %v543, 0.17677669
        %v546 = vmul.f32 %v544, 0.17677669
        %v547 = vlaneseq
        %v548 = vshrl.u32 %v547, 7
        %v549 = vsub.s32 1, %v548
        %v550 = vrot.slane %v332, %v549
        %v551 = vadd.f32 %v456, %v550
        %v552 = vadd.f32 %v462, %v550
        %v553 = vlaneseq
        %v554 = vshrl.u32 %v553, 7
        %v555 = vsub.s32 2, %v554
        %v556 = vrot.slane %v332, %v555
        %v557 = vadd.f32 %v531, %v556
        %v558 = vadd.f32 %v536, %v556
        %559 = vmatprep.subr.mxu0 0.0
        %560 = vmatpush1.xpose.msra.mxu0 %v551
        %561 = vmatprep.subr.mxu0 0.0
        %562 = vmatpush1.xpose.msra.mxu0 0.0
        %563 = vmatprep.subr.mxu0 0.0
        %564 = vmatpush1.xpose.msra.mxu0 0.0
        %565 = vmatprep.subr.mxu0 0.0
        %566 = vmatpush1.xpose.msra.mxu0 0.0
        %567 = vmatprep.subr.mxu0 0.0
        %568 = vmatpush1.xpose.msra.mxu0 0.0
        %569 = vmatprep.subr.mxu0 0.0
        %570 = vmatpush1.xpose.msra.mxu0 0.0
        %571 = vmatprep.subr.mxu0 0.0
        %572 = vmatpush1.xpose.msra.mxu0 0.0
        %573 = vmatprep.subr.mxu0 0.0
        %574 = vmatpush1.xpose.msra.mxu0 0.0
        %575 = vmatprep.subr.mxu0 0.0
        %576 = vmatpush1.xpose.msra.mxu0 0.0
        %577 = vmatprep.subr.mxu0 0.0
        %578 = vmatpush1.xpose.msra.mxu0 0.0
        %579 = vmatprep.subr.mxu0 0.0
        %580 = vmatpush1.xpose.msra.mxu0 0.0
        %581 = vmatprep.subr.mxu0 0.0
        %582 = vmatpush1.xpose.msra.mxu0 0.0
        %583 = vmatprep.subr.mxu0 0.0
        %584 = vmatpush1.xpose.msra.mxu0 0.0
        %585 = vmatprep.subr.mxu0 0.0
        %586 = vmatpush1.xpose.msra.mxu0 0.0
        %587 = vmatprep.subr.mxu0 0.0
        %588 = vmatpush1.xpose.msra.mxu0 0.0
        %589 = vmatprep.subr.mxu0 0.0
        %590 = vmatpush1.xpose.msra.mxu0 0.0
        %591 = vmatprep.subr.mxu0 0.0
        %592 = vmatpush1.xpose.msra.mxu0 0.0
        %593 = vmatprep.subr.mxu0 0.0
        %594 = vmatpush1.xpose.msra.mxu0 0.0
        %595 = vmatprep.subr.mxu0 0.0
        %596 = vmatpush1.xpose.msra.mxu0 0.0
        %597 = vmatprep.subr.mxu0 0.0
        %598 = vmatpush1.xpose.msra.mxu0 0.0
        %599 = vmatprep.subr.mxu0 0.0
        %600 = vmatpush1.xpose.msra.mxu0 0.0
        %601 = vmatprep.subr.mxu0 0.0
        %602 = vmatpush1.xpose.msra.mxu0 0.0
        %603 = vmatprep.subr.mxu0 0.0
        %604 = vmatpush1.xpose.msra.mxu0 0.0
        %605 = vmatprep.subr.mxu0 0.0
        %606 = vmatpush1.xpose.msra.mxu0 0.0
        %607 = vmatprep.subr.mxu0 0.0
        %608 = vmatpush1.xpose.msra.mxu0 0.0
        %609 = vmatprep.subr.mxu0 0.0
        %610 = vmatpush1.xpose.msra.mxu0 0.0
        %611 = vmatprep.subr.mxu0 0.0
        %612 = vmatpush1.xpose.msra.mxu0 0.0
        %613 = vmatprep.subr.mxu0 0.0
        %614 = vmatpush1.xpose.msra.mxu0 0.0
        %615 = vmatprep.subr.mxu0 0.0
        %616 = vmatpush1.xpose.msra.mxu0 0.0
        %617 = vmatprep.subr.mxu0 0.0
        %618 = vmatpush1.xpose.msra.mxu0 0.0
        %619 = vmatprep.subr.mxu0 0.0
        %620 = vmatpush1.xpose.msra.mxu0 0.0
        %621 = vmatprep.subr.mxu0 0.0
        %622 = vmatpush1.xpose.msra.mxu0 0.0
        %623 = vmatprep.mubr.f32.mxu0 0.0
        %624 = vmatmul.mubr.f32.gmra.mrb[0].mxu0 %v545
        %v625 = vpop.f32.mrb[0].mxu0
        %v626 = vadd.f32 0.0, %v625
        %v627 = vpop.f32.mrb[0].mxu0
        %628 = vdwg.mxu0
        %629 = vmatprep.subr.mxu0 0.0
        %630 = vmatpush1.xpose.msra.mxu0 %v552
        %631 = vmatprep.subr.mxu0 0.0
        %632 = vmatpush1.xpose.msra.mxu0 0.0
        %633 = vmatprep.subr.mxu0 0.0
        %634 = vmatpush1.xpose.msra.mxu0 0.0
        %635 = vmatprep.subr.mxu0 0.0
        %636 = vmatpush1.xpose.msra.mxu0 0.0
        %637 = vmatprep.subr.mxu0 0.0
        %638 = vmatpush1.xpose.msra.mxu0 0.0
        %639 = vmatprep.subr.mxu0 0.0
        %640 = vmatpush1.xpose.msra.mxu0 0.0
        %641 = vmatprep.subr.mxu0 0.0
        %642 = vmatpush1.xpose.msra.mxu0 0.0
        %643 = vmatprep.subr.mxu0 0.0
        %644 = vmatpush1.xpose.msra.mxu0 0.0
        %645 = vmatprep.subr.mxu0 0.0
        %646 = vmatpush1.xpose.msra.mxu0 0.0
        %647 = vmatprep.subr.mxu0 0.0
        %648 = vmatpush1.xpose.msra.mxu0 0.0
        %649 = vmatprep.subr.mxu0 0.0
        %650 = vmatpush1.xpose.msra.mxu0 0.0
        %651 = vmatprep.subr.mxu0 0.0
        %652 = vmatpush1.xpose.msra.mxu0 0.0
        %653 = vmatprep.subr.mxu0 0.0
        %654 = vmatpush1.xpose.msra.mxu0 0.0
        %655 = vmatprep.subr.mxu0 0.0
        %656 = vmatpush1.xpose.msra.mxu0 0.0
        %657 = vmatprep.subr.mxu0 0.0
        %658 = vmatpush1.xpose.msra.mxu0 0.0
        %659 = vmatprep.subr.mxu0 0.0
        %660 = vmatpush1.xpose.msra.mxu0 0.0
        %661 = vmatprep.subr.mxu0 0.0
        %662 = vmatpush1.xpose.msra.mxu0 0.0
        %663 = vmatprep.subr.mxu0 0.0
        %664 = vmatpush1.xpose.msra.mxu0 0.0
        %665 = vmatprep.subr.mxu0 0.0
        %666 = vmatpush1.xpose.msra.mxu0 0.0
        %667 = vmatprep.subr.mxu0 0.0
        %668 = vmatpush1.xpose.msra.mxu0 0.0
        %669 = vmatprep.subr.mxu0 0.0
        %670 = vmatpush1.xpose.msra.mxu0 0.0
        %671 = vmatprep.subr.mxu0 0.0
        %672 = vmatpush1.xpose.msra.mxu0 0.0
        %673 = vmatprep.subr.mxu0 0.0
        %674 = vmatpush1.xpose.msra.mxu0 0.0
        %675 = vmatprep.subr.mxu0 0.0
        %676 = vmatpush1.xpose.msra.mxu0 0.0
        %677 = vmatprep.subr.mxu0 0.0
        %678 = vmatpush1.xpose.msra.mxu0 0.0
        %679 = vmatprep.subr.mxu0 0.0
        %680 = vmatpush1.xpose.msra.mxu0 0.0
        %681 = vmatprep.subr.mxu0 0.0
        %682 = vmatpush1.xpose.msra.mxu0 0.0
        %683 = vmatprep.subr.mxu0 0.0
        %684 = vmatpush1.xpose.msra.mxu0 0.0
        %685 = vmatprep.subr.mxu0 0.0
        %686 = vmatpush1.xpose.msra.mxu0 0.0
        %687 = vmatprep.subr.mxu0 0.0
        %688 = vmatpush1.xpose.msra.mxu0 0.0
        %689 = vmatprep.subr.mxu0 0.0
        %690 = vmatpush1.xpose.msra.mxu0 0.0
        %691 = vmatprep.subr.mxu0 0.0
        %692 = vmatpush1.xpose.msra.mxu0 0.0
        %693 = vmatprep.mubr.f32.mxu0 0.0
        %694 = vmatmul.mubr.f32.gmra.mrb[0].mxu0 %v546
        %v695 = vpop.f32.mrb[0].mxu0
        %v696 = vadd.f32 0.0, %v695
        %v697 = vpop.f32.mrb[0].mxu0
        %698 = vdwg.mxu0
        %vm699 = vcmask 64512
        %v700 = vsel %vm699, %v626, -inf
        %701 = vmax.xlane.f32.xlu0 %v700
        %v702 = vpop.xlane.xlu0 %701
        %v703 = vsel %vm699, %v696, -inf
        %704 = vmax.xlane.f32.xlu0 %v703
        %v705 = vpop.xlane.xlu0 %704
        %v706 = vsub.f32 %v626, %v702
        %v707 = vsub.f32 %v696, %v705
        %v708 = vmul.f32 %v706, 1.442695
        %v709 = vpow.pop %v708
        %v710 = vmul.f32 %v707, 1.442695
        %v711 = vpow.pop %v710
        %v712 = vsel %vm699, %v709, 0.0
        %713 = vadd.xlane.f32.xlu0 %v712
        %v714 = vpop.xlane.xlu0 %713
        %v715 = vsel %vm699, %v711, 0.0
        %716 = vadd.xlane.f32.xlu0 %v715
        %v717 = vpop.xlane.xlu0 %716
        %v718 = vrcp.pop %v714
        %v719 = vrcp.pop %v717
        %v720 = vmul.f32 %v709, %v718
        %v721 = vmul.f32 %v711, %v719
        %v723 = vsel %vm699, %v720, 0
        %725 = vmatprep.subr.mxu0 0.0
        %726 = vmatpush1.msra.mxu0 %v557
        %727 = vmatprep.subr.mxu0 0.0
        %728 = vmatpush1.msra.mxu0 0.0
        %729 = vmatprep.subr.mxu0 0.0
        %730 = vmatpush1.msra.mxu0 0.0
        %731 = vmatprep.subr.mxu0 0.0
        %732 = vmatpush1.msra.mxu0 0.0
        %733 = vmatprep.subr.mxu0 0.0
        %734 = vmatpush1.msra.mxu0 0.0
        %735 = vmatprep.subr.mxu0 0.0
        %736 = vmatpush1.msra.mxu0 0.0
        %737 = vmatprep.subr.mxu0 0.0
        %738 = vmatpush1.msra.mxu0 0.0
        %739 = vmatprep.subr.mxu0 0.0
        %740 = vmatpush1.msra.mxu0 0.0
        %741 = vmatprep.subr.mxu0 0.0
        %742 = vmatpush1.msra.mxu0 0.0
        %743 = vmatprep.subr.mxu0 0.0
        %744 = vmatpush1.msra.mxu0 0.0
        %745 = vmatprep.subr.mxu0 0.0
        %746 = vmatpush1.msra.mxu0 0.0
        %747 = vmatprep.subr.mxu0 0.0
        %748 = vmatpush1.msra.mxu0 0.0
        %749 = vmatprep.subr.mxu0 0.0
        %750 = vmatpush1.msra.mxu0 0.0
        %751 = vmatprep.subr.mxu0 0.0
        %752 = vmatpush1.msra.mxu0 0.0
        %753 = vmatprep.subr.mxu0 0.0
        %754 = vmatpush1.msra.mxu0 0.0
        %755 = vmatprep.subr.mxu0 0.0
        %756 = vmatpush1.msra.mxu0 0.0
        %757 = vmatprep.subr.mxu0 0.0
        %758 = vmatpush1.msra.mxu0 0.0
        %759 = vmatprep.subr.mxu0 0.0
        %760 = vmatpush1.msra.mxu0 0.0
        %761 = vmatprep.subr.mxu0 0.0
        %762 = vmatpush1.msra.mxu0 0.0
        %763 = vmatprep.subr.mxu0 0.0
        %764 = vmatpush1.msra.mxu0 0.0
        %765 = vmatprep.subr.mxu0 0.0
        %766 = vmatpush1.msra.mxu0 0.0
        %767 = vmatprep.subr.mxu0 0.0
        %768 = vmatpush1.msra.mxu0 0.0
        %769 = vmatprep.subr.mxu0 0.0
        %770 = vmatpush1.msra.mxu0 0.0
        %771 = vmatprep.subr.mxu0 0.0
        %772 = vmatpush1.msra.mxu0 0.0
        %773 = vmatprep.subr.mxu0 0.0
        %774 = vmatpush1.msra.mxu0 0.0
        %775 = vmatprep.subr.mxu0 0.0
        %776 = vmatpush1.msra.mxu0 0.0
        %777 = vmatprep.subr.mxu0 0.0
        %778 = vmatpush1.msra.mxu0 0.0
        %779 = vmatprep.subr.mxu0 0.0
        %780 = vmatpush1.msra.mxu0 0.0
        %781 = vmatprep.subr.mxu0 0.0
        %782 = vmatpush1.msra.mxu0 0.0
        %783 = vmatprep.subr.mxu0 0.0
        %784 = vmatpush1.msra.mxu0 0.0
        %785 = vmatprep.subr.mxu0 0.0
        %786 = vmatpush1.msra.mxu0 0.0
        %787 = vmatprep.subr.mxu0 0.0
        %788 = vmatpush1.msra.mxu0 0.0
        %789 = vmatprep.mubr.f32.mxu0 0.0
        %790 = vmatmul.mubr.f32.gmra.mrb[0].mxu0 %v723
        %v791 = vpop.f32.mrb[0].mxu0
        %v792 = vadd.f32 0.0, %v791
        %v793 = vpop.f32.mrb[0].mxu0
        %794 = vdwg.mxu0
        %v796 = vsel %vm699, %v721, 0
        %798 = vmatprep.subr.mxu0 0.0
        %799 = vmatpush1.msra.mxu0 %v558
        %800 = vmatprep.subr.mxu0 0.0
        %801 = vmatpush1.msra.mxu0 0.0
        %802 = vmatprep.subr.mxu0 0.0
        %803 = vmatpush1.msra.mxu0 0.0
        %804 = vmatprep.subr.mxu0 0.0
        %805 = vmatpush1.msra.mxu0 0.0
        %806 = vmatprep.subr.mxu0 0.0
        %807 = vmatpush1.msra.mxu0 0.0
        %808 = vmatprep.subr.mxu0 0.0
        %809 = vmatpush1.msra.mxu0 0.0
        %810 = vmatprep.subr.mxu0 0.0
        %811 = vmatpush1.msra.mxu0 0.0
        %812 = vmatprep.subr.mxu0 0.0
        %813 = vmatpush1.msra.mxu0 0.0
        %814 = vmatprep.subr.mxu0 0.0
        %815 = vmatpush1.msra.mxu0 0.0
        %816 = vmatprep.subr.mxu0 0.0
        %817 = vmatpush1.msra.mxu0 0.0
        %818 = vmatprep.subr.mxu0 0.0
        %819 = vmatpush1.msra.mxu0 0.0
        %820 = vmatprep.subr.mxu0 0.0
        %821 = vmatpush1.msra.mxu0 0.0
        %822 = vmatprep.subr.mxu0 0.0
        %823 = vmatpush1.msra.mxu0 0.0
        %824 = vmatprep.subr.mxu0 0.0
        %825 = vmatpush1.msra.mxu0 0.0
        %826 = vmatprep.subr.mxu0 0.0
        %827 = vmatpush1.msra.mxu0 0.0
        %828 = vmatprep.subr.mxu0 0.0
        %829 = vmatpush1.msra.mxu0 0.0
        %830 = vmatprep.subr.mxu0 0.0
        %831 = vmatpush1.msra.mxu0 0.0
        %832 = vmatprep.subr.mxu0 0.0
        %833 = vmatpush1.msra.mxu0 0.0
        %834 = vmatprep.subr.mxu0 0.0
        %835 = vmatpush1.msra.mxu0 0.0
        %836 = vmatprep.subr.mxu0 0.0
        %837 = vmatpush1.msra.mxu0 0.0
        %838 = vmatprep.subr.mxu0 0.0
        %839 = vmatpush1.msra.mxu0 0.0
        %840 = vmatprep.subr.mxu0 0.0
        %841 = vmatpush1.msra.mxu0 0.0
        %842 = vmatprep.subr.mxu0 0.0
        %843 = vmatpush1.msra.mxu0 0.0
        %844 = vmatprep.subr.mxu0 0.0
        %845 = vmatpush1.msra.mxu0 0.0
        %846 = vmatprep.subr.mxu0 0.0
        %847 = vmatpush1.msra.mxu0 0.0
        %848 = vmatprep.subr.mxu0 0.0
        %849 = vmatpush1.msra.mxu0 0.0
        %850 = vmatprep.subr.mxu0 0.0
        %851 = vmatpush1.msra.mxu0 0.0
        %852 = vmatprep.subr.mxu0 0.0
        %853 = vmatpush1.msra.mxu0 0.0
        %854 = vmatprep.subr.mxu0 0.0
        %855 = vmatpush1.msra.mxu0 0.0
        %856 = vmatprep.subr.mxu0 0.0
        %857 = vmatpush1.msra.mxu0 0.0
        %858 = vmatprep.subr.mxu0 0.0
        %859 = vmatpush1.msra.mxu0 0.0
        %860 = vmatprep.subr.mxu0 0.0
        %861 = vmatpush1.msra.mxu0 0.0
        %862 = vmatprep.mubr.f32.mxu0 0.0
        %863 = vmatmul.mubr.f32.gmra.mrb[0].mxu0 %v796
        %v864 = vpop.f32.mrb[0].mxu0
        %v865 = vadd.f32 0.0, %v864
        %v866 = vpop.f32.mrb[0].mxu0
        %867 = vdwg.mxu0
        %v868 = vld [vmem:[#allocation7] sm:$0xff]
        %v869 = vld [vmem:[#allocation7 + $0x8] sm:$0xff]
        %v870 = vld [vmem:[#allocation7 + $0x10] sm:$0xff]
        %v871 = vld [vmem:[#allocation7 + $0x18] sm:$0xff]
        %v872 = vld [vmem:[#allocation7 + $0x20] sm:$0xff]
        %v873 = vld [vmem:[#allocation7 + $0x28] sm:$0xff]
        %v874 = vld [vmem:[#allocation7 + $0x30] sm:$0xff]
        %v875 = vld [vmem:[#allocation7 + $0x38] sm:$0xff]
        %v876 = vld [vmem:[#allocation7 + $0x40] sm:$0xff]
        %v877 = vld [vmem:[#allocation7 + $0x48] sm:$0xff]
        %v878 = vld [vmem:[#allocation7 + $0x50] sm:$0xff]
        %v879 = vld [vmem:[#allocation7 + $0x58] sm:$0xff]
        %v880 = vld [vmem:[#allocation7 + $0x60] sm:$0xff]
        %v881 = vld [vmem:[#allocation7 + $0x68] sm:$0xff]
        %v882 = vld [vmem:[#allocation7 + $0x70] sm:$0xff]
        %v883 = vld [vmem:[#allocation7 + $0x78] sm:$0xff]
        %v884 = vlaneseq
        %v885 = vshrl.u32 %v884, 7
        %v886 = vsub.s32 3, %v885
        %v887 = vrot.slane %v332, %v886
        %888 = vmatprep.subr.mxu0 0.0
        %889 = vmatpush1.msra.mxu0 %v868
        %890 = vmatprep.subr.mxu0 0.0
        %891 = vmatpush1.msra.mxu0 %v869
        %892 = vmatprep.subr.mxu0 0.0
        %893 = vmatpush1.msra.mxu0 %v870
        %894 = vmatprep.subr.mxu0 0.0
        %895 = vmatpush1.msra.mxu0 %v871
        %896 = vmatprep.subr.mxu0 0.0
        %897 = vmatpush1.msra.mxu0 %v872
        %898 = vmatprep.subr.mxu0 0.0
        %899 = vmatpush1.msra.mxu0 %v873
        %900 = vmatprep.subr.mxu0 0.0
        %901 = vmatpush1.msra.mxu0 %v874
        %902 = vmatprep.subr.mxu0 0.0
        %903 = vmatpush1.msra.mxu0 %v875
        %904 = vmatprep.subr.mxu0 0.0
        %905 = vmatpush1.msra.mxu0 %v876
        %906 = vmatprep.subr.mxu0 0.0
        %907 = vmatpush1.msra.mxu0 %v877
        %908 = vmatprep.subr.mxu0 0.0
        %909 = vmatpush1.msra.mxu0 %v878
        %910 = vmatprep.subr.mxu0 0.0
        %911 = vmatpush1.msra.mxu0 %v879
        %912 = vmatprep.subr.mxu0 0.0
        %913 = vmatpush1.msra.mxu0 %v880
        %914 = vmatprep.subr.mxu0 0.0
        %915 = vmatpush1.msra.mxu0 %v881
        %916 = vmatprep.subr.mxu0 0.0
        %917 = vmatpush1.msra.mxu0 %v882
        %918 = vmatprep.subr.mxu0 0.0
        %919 = vmatpush1.msra.mxu0 %v883
        %920 = vmatprep.subr.mxu0 0.0
        %921 = vmatpush1.msra.mxu0 0.0
        %922 = vmatprep.subr.mxu0 0.0
        %923 = vmatpush1.msra.mxu0 0.0
        %924 = vmatprep.subr.mxu0 0.0
        %925 = vmatpush1.msra.mxu0 0.0
        %926 = vmatprep.subr.mxu0 0.0
        %927 = vmatpush1.msra.mxu0 0.0
        %928 = vmatprep.subr.mxu0 0.0
        %929 = vmatpush1.msra.mxu0 0.0
        %930 = vmatprep.subr.mxu0 0.0
        %931 = vmatpush1.msra.mxu0 0.0
        %932 = vmatprep.subr.mxu0 0.0
        %933 = vmatpush1.msra.mxu0 0.0
        %934 = vmatprep.subr.mxu0 0.0
        %935 = vmatpush1.msra.mxu0 0.0
        %936 = vmatprep.subr.mxu0 0.0
        %937 = vmatpush1.msra.mxu0 0.0
        %938 = vmatprep.subr.mxu0 0.0
        %939 = vmatpush1.msra.mxu0 0.0
        %940 = vmatprep.subr.mxu0 0.0
        %941 = vmatpush1.msra.mxu0 0.0
        %942 = vmatprep.subr.mxu0 0.0
        %943 = vmatpush1.msra.mxu0 0.0
        %944 = vmatprep.subr.mxu0 0.0
        %945 = vmatpush1.msra.mxu0 0.0
        %946 = vmatprep.subr.mxu0 0.0
        %947 = vmatpush1.msra.mxu0 0.0
        %948 = vmatprep.subr.mxu0 0.0
        %949 = vmatpush1.msra.mxu0 0.0
        %950 = vmatprep.subr.mxu0 0.0
        %951 = vmatpush1.msra.mxu0 0.0
        %952 = vmatprep.mubr.f32.mxu0 0.0
        %953 = vmatmul.mubr.f32.gmra.mrb[0].mxu0 %v792
        %v954 = vpop.f32.mrb[0].mxu0
        %v955 = vadd.f32 %v887, %v954
        %v956 = vpop.f32.mrb[0].mxu0
        %957 = vmatprep.mubr.f32.mxu0 0.0
        %958 = vmatmul.mubr.f32.gmra.mrb[0].mxu0 %v865
        %v959 = vpop.f32.mrb[0].mxu0
        %v960 = vadd.f32 %v887, %v959
        %v961 = vpop.f32.mrb[0].mxu0
        %962 = vdwg.mxu0
        %v963 = vadd.f32 %v330, %v955
        %v964 = vadd.f32 %v331, %v960
        %965 = vadd.xlane.f32.xlu0 %v963
        %v966 = vpop.xlane.xlu0 %965
        %967 = vadd.xlane.f32.xlu0 %v964
        %v968 = vpop.xlane.xlu0 %967
        %v969 = vmul.f32 %v966, 0.03125
        %v970 = vmul.f32 %v968, 0.03125
        %v971 = vsub.f32 %v963, %v969
        %v972 = vsub.f32 %v964, %v970
        %v973 = vmul.f32 %v971, %v338
        %v974 = vmul.f32 %v972, %v338
        %v975 = vmul.f32 %v973, %v973
        %v976 = vmul.f32 %v974, %v974
        %977 = vadd.xlane.f32.xlu0 %v975
        %v978 = vpop.xlane.xlu0 %977
        %979 = vadd.xlane.f32.xlu0 %v976
        %v980 = vpop.xlane.xlu0 %979
        %v981 = vmul.f32 %v978, 0.03125
        %v982 = vmul.f32 %v980, 0.03125
        %v983 = vadd.f32 %v981, 1e-05
        %v984 = vadd.f32 %v982, 1e-05
        %v985 = vrsqrt.pop %v983
        %v986 = vrsqrt.pop %v984
        %v987 = vmul.f32 %v973, %v985
        %v988 = vmul.f32 %v974, %v986
        %v989 = vlaneseq
        %v990 = vshrl.u32 %v989, 7
        %v991 = vsub.s32 4, %v990
        %v992 = vrot.slane %v332, %v991
        %v993 = vmul.f32 %v987, %v992
        %v994 = vmul.f32 %v988, %v992
        %v995 = vlaneseq
        %v996 = vshrl.u32 %v995, 7
        %v997 = vsub.s32 5, %v996
        %v998 = vrot.slane %v332, %v997
        %v999 = vadd.f32 %v993, %v998
        %v1000 = vadd.f32 %v994, %v998
        %v1001 = vld [vmem:[#allocation8] sm:$0xff]
        %v1002 = vld [vmem:[#allocation8 + $0x8] sm:$0xff]
        %v1003 = vld [vmem:[#allocation8 + $0x10] sm:$0xff]
        %v1004 = vld [vmem:[#allocation8 + $0x18] sm:$0xff]
        %v1005 = vld [vmem:[#allocation8 + $0x20] sm:$0xff]
        %v1006 = vld [vmem:[#allocation8 + $0x28] sm:$0xff]
        %v1007 = vld [vmem:[#allocation8 + $0x30] sm:$0xff]
        %v1008 = vld [vmem:[#allocation8 + $0x38] sm:$0xff]
        %v1009 = vld [vmem:[#allocation8 + $0x40] sm:$0xff]
        %v1010 = vld [vmem:[#allocation8 + $0x48] sm:$0xff]
        %v1011 = vld [vmem:[#allocation8 + $0x50] sm:$0xff]
        %v1012 = vld [vmem:[#allocation8 + $0x58] sm:$0xff]
        %v1013 = vld [vmem:[#allocation8 + $0x60] sm:$0xff]
        %v1014 = vld [vmem:[#allocation8 + $0x68] sm:$0xff]
        %v1015 = vld [vmem:[#allocation8 + $0x70] sm:$0xff]
        %v1016 = vld [vmem:[#allocation8 + $0x78] sm:$0xff]
        %v1017 = vlaneseq
        %v1018 = vshrl.u32 %v1017, 7
        %v1019 = vsub.s32 6, %v1018
        %v1020 = vrot.slane %v332, %v1019
        %1021 = vmatprep.subr.mxu0 0.0
        %1022 = vmatpush1.msra.mxu0 %v1001
        %1023 = vmatprep.subr.mxu0 0.0
        %1024 = vmatpush1.msra.mxu0 %v1002
        %1025 = vmatprep.subr.mxu0 0.0
        %1026 = vmatpush1.msra.mxu0 %v1003
        %1027 = vmatprep.subr.mxu0 0.0
        %1028 = vmatpush1.msra.mxu0 %v1004
        %1029 = vmatprep.subr.mxu0 0.0
        %1030 = vmatpush1.msra.mxu0 %v1005
        %1031 = vmatprep.subr.mxu0 0.0
        %1032 = vmatpush1.msra.mxu0 %v1006
        %1033 = vmatprep.subr.mxu0 0.0
        %1034 = vmatpush1.msra.mxu0 %v1007
        %1035 = vmatprep.subr.mxu0 0.0
        %1036 = vmatpush1.msra.mxu0 %v1008
        %1037 = vmatprep.subr.mxu0 0.0
        %1038 = vmatpush1.msra.mxu0 %v1009
        %1039 = vmatprep.subr.mxu0 0.0
        %1040 = vmatpush1.msra.mxu0 %v1010
        %1041 = vmatprep.subr.mxu0 0.0
        %1042 = vmatpush1.msra.mxu0 %v1011
        %1043 = vmatprep.subr.mxu0 0.0
        %1044 = vmatpush1.msra.mxu0 %v1012
        %1045 = vmatprep.subr.mxu0 0.0
        %1046 = vmatpush1.msra.mxu0 %v1013
        %1047 = vmatprep.subr.mxu0 0.0
        %1048 = vmatpush1.msra.mxu0 %v1014
        %1049 = vmatprep.subr.mxu0 0.0
        %1050 = vmatpush1.msra.mxu0 %v1015
        %1051 = vmatprep.subr.mxu0 0.0
        %1052 = vmatpush1.msra.mxu0 %v1016
        %1053 = vmatprep.subr.mxu0 0.0
        %1054 = vmatpush1.msra.mxu0 0.0
        %1055 = vmatprep.subr.mxu0 0.0
        %1056 = vmatpush1.msra.mxu0 0.0
        %1057 = vmatprep.subr.mxu0 0.0
        %1058 = vmatpush1.msra.mxu0 0.0
        %1059 = vmatprep.subr.mxu0 0.0
        %1060 = vmatpush1.msra.mxu0 0.0
        %1061 = vmatprep.subr.mxu0 0.0
        %1062 = vmatpush1.msra.mxu0 0.0
        %1063 = vmatprep.subr.mxu0 0.0
        %1064 = vmatpush1.msra.mxu0 0.0
        %1065 = vmatprep.subr.mxu0 0.0
        %1066 = vmatpush1.msra.mxu0 0.0
        %1067 = vmatprep.subr.mxu0 0.0
        %1068 = vmatpush1.msra.mxu0 0.0
        %1069 = vmatprep.subr.mxu0 0.0
        %1070 = vmatpush1.msra.mxu0 0.0
        %1071 = vmatprep.subr.mxu0 0.0
        %1072 = vmatpush1.msra.mxu0 0.0
        %1073 = vmatprep.subr.mxu0 0.0
        %1074 = vmatpush1.msra.mxu0 0.0
        %1075 = vmatprep.subr.mxu0 0.0
        %1076 = vmatpush1.msra.mxu0 0.0
        %1077 = vmatprep.subr.mxu0 0.0
        %1078 = vmatpush1.msra.mxu0 0.0
        %1079 = vmatprep.subr.mxu0 0.0
        %1080 = vmatpush1.msra.mxu0 0.0
        %1081 = vmatprep.subr.mxu0 0.0
        %1082 = vmatpush1.msra.mxu0 0.0
        %1083 = vmatprep.subr.mxu0 0.0
        %1084 = vmatpush1.msra.mxu0 0.0
        %1085 = vmatprep.mubr.f32.mxu0 0.0
        %1086 = vmatmul.mubr.f32.gmra.mrb[0].mxu0 %v999
        %v1087 = vpop.f32.mrb[0].mxu0
        %v1088 = vadd.f32 %v1020, %v1087
        %v1089 = vpop.f32.mrb[0].mxu0
        %1090 = vmatprep.mubr.f32.mxu0 0.0
        %1091 = vmatmul.mubr.f32.gmra.mrb[0].mxu0 %v1000
        %v1092 = vpop.f32.mrb[0].mxu0
        %v1093 = vadd.f32 %v1020, %v1092
        %v1094 = vpop.f32.mrb[0].mxu0
        %1095 = vdwg.mxu0
        %v1096 = vmax.f32 %v1088, 0.0
        %v1097 = vmax.f32 %v1093, 0.0
        %v1098 = vld [vmem:[#allocation10] sm:$0xff]
        %v1099 = vld [vmem:[#allocation10 + $0x8] sm:$0xff]
        %v1100 = vld [vmem:[#allocation10 + $0x10] sm:$0xff]
        %v1101 = vld [vmem:[#allocation10 + $0x18] sm:$0xff]
        %v1102 = vld [vmem:[#allocation10 + $0x20] sm:$0xff]
        %v1103 = vld [vmem:[#allocation10 + $0x28] sm:$0xff]
        %v1104 = vld [vmem:[#allocation10 + $0x30] sm:$0xff]
        %v1105 = vld [vmem:[#allocation10 + $0x38] sm:$0xff]
        %v1106 = vld [vmem:[#allocation10 + $0x40] sm:$0xff]
        %v1107 = vld [vmem:[#allocation10 + $0x48] sm:$0xff]
        %v1108 = vld [vmem:[#allocation10 + $0x50] sm:$0xff]
        %v1109 = vld [vmem:[#allocation10 + $0x58] sm:$0xff]
        %v1110 = vld [vmem:[#allocation10 + $0x60] sm:$0xff]
        %v1111 = vld [vmem:[#allocation10 + $0x68] sm:$0xff]
        %v1112 = vld [vmem:[#allocation10 + $0x70] sm:$0xff]
        %v1113 = vld [vmem:[#allocation10 + $0x78] sm:$0xff]
        %v1114 = vlaneseq
        %v1115 = vshrl.u32 %v1114, 7
        %v1116 = vsub.s32 7, %v1115
        %v1117 = vrot.slane %v332, %v1116
        %1118 = vmatprep.subr.mxu0 0.0
        %1119 = vmatpush1.msra.mxu0 %v1098
        %1120 = vmatprep.subr.mxu0 0.0
        %1121 = vmatpush1.msra.mxu0 %v1099
        %1122 = vmatprep.subr.mxu0 0.0
        %1123 = vmatpush1.msra.mxu0 %v1100
        %1124 = vmatprep.subr.mxu0 0.0
        %1125 = vmatpush1.msra.mxu0 %v1101
        %1126 = vmatprep.subr.mxu0 0.0
        %1127 = vmatpush1.msra.mxu0 %v1102
        %1128 = vmatprep.subr.mxu0 0.0
        %1129 = vmatpush1.msra.mxu0 %v1103
        %1130 = vmatprep.subr.mxu0 0.0
        %1131 = vmatpush1.msra.mxu0 %v1104
        %1132 = vmatprep.subr.mxu0 0.0
        %1133 = vmatpush1.msra.mxu0 %v1105
        %1134 = vmatprep.subr.mxu0 0.0
        %1135 = vmatpush1.msra.mxu0 %v1106
        %1136 = vmatprep.subr.mxu0 0.0
        %1137 = vmatpush1.msra.mxu0 %v1107
        %1138 = vmatprep.subr.mxu0 0.0
        %1139 = vmatpush1.msra.mxu0 %v1108
        %1140 = vmatprep.subr.mxu0 0.0
        %1141 = vmatpush1.msra.mxu0 %v1109
        %1142 = vmatprep.subr.mxu0 0.0
        %1143 = vmatpush1.msra.mxu0 %v1110
        %1144 = vmatprep.subr.mxu0 0.0
        %1145 = vmatpush1.msra.mxu0 %v1111
        %1146 = vmatprep.subr.mxu0 0.0
        %1147 = vmatpush1.msra.mxu0 %v1112
        %1148 = vmatprep.subr.mxu0 0.0
        %1149 = vmatpush1.msra.mxu0 %v1113
        %1150 = vmatprep.subr.mxu0 0.0
        %1151 = vmatpush1.msra.mxu0 0.0
        %1152 = vmatprep.subr.mxu0 0.0
        %1153 = vmatpush1.msra.mxu0 0.0
        %1154 = vmatprep.subr.mxu0 0.0
        %1155 = vmatpush1.msra.mxu0 0.0
        %1156 = vmatprep.subr.mxu0 0.0
        %1157 = vmatpush1.msra.mxu0 0.0
        %1158 = vmatprep.subr.mxu0 0.0
        %1159 = vmatpush1.msra.mxu0 0.0
        %1160 = vmatprep.subr.mxu0 0.0
        %1161 = vmatpush1.msra.mxu0 0.0
        %1162 = vmatprep.subr.mxu0 0.0
        %1163 = vmatpush1.msra.mxu0 0.0
        %1164 = vmatprep.subr.mxu0 0.0
        %1165 = vmatpush1.msra.mxu0 0.0
        %1166 = vmatprep.subr.mxu0 0.0
        %1167 = vmatpush1.msra.mxu0 0.0
        %1168 = vmatprep.subr.mxu0 0.0
        %1169 = vmatpush1.msra.mxu0 0.0
        %1170 = vmatprep.subr.mxu0 0.0
        %1171 = vmatpush1.msra.mxu0 0.0
        %1172 = vmatprep.subr.mxu0 0.0
        %1173 = vmatpush1.msra.mxu0 0.0
        %1174 = vmatprep.subr.mxu0 0.0
        %1175 = vmatpush1.msra.mxu0 0.0
        %1176 = vmatprep.subr.mxu0 0.0
        %1177 = vmatpush1.msra.mxu0 0.0
        %1178 = vmatprep.subr.mxu0 0.0
        %1179 = vmatpush1.msra.mxu0 0.0
        %1180 = vmatprep.subr.mxu0 0.0
        %1181 = vmatpush1.msra.mxu0 0.0
        %1182 = vmatprep.mubr.f32.mxu0 0.0
        %1183 = vmatmul.mubr.f32.gmra.mrb[0].mxu0 %v1096
        %v1184 = vpop.f32.mrb[0].mxu0
        %v1185 = vadd.f32 %v1117, %v1184
        %v1186 = vpop.f32.mrb[0].mxu0
        %1187 = vmatprep.mubr.f32.mxu0 0.0
        %1188 = vmatmul.mubr.f32.gmra.mrb[0].mxu0 %v1097
        %v1189 = vpop.f32.mrb[0].mxu0
        %v1190 = vadd.f32 %v1117, %v1189
        %v1191 = vpop.f32.mrb[0].mxu0
        %1192 = vdwg.mxu0
        %v1193 = vadd.f32 %v999, %v1185
        %v1194 = vadd.f32 %v1000, %v1190
        %1195 = vadd.xlane.f32.xlu0 %v1193
        %v1196 = vpop.xlane.xlu0 %1195
        %1197 = vadd.xlane.f32.xlu0 %v1194
        %v1198 = vpop.xlane.xlu0 %1197
        %v1199 = vmul.f32 %v1196, 0.03125
        %v1200 = vmul.f32 %v1198, 0.03125
        %v1201 = vsub.f32 %v1193, %v1199
        %v1202 = vsub.f32 %v1194, %v1200
        %v1203 = vmul.f32 %v1201, %v338
        %v1204 = vmul.f32 %v1202, %v338
        %v1205 = vmul.f32 %v1203, %v1203
        %v1206 = vmul.f32 %v1204, %v1204
        %1207 = vadd.xlane.f32.xlu0 %v1205
        %v1208 = vpop.xlane.xlu0 %1207
        %1209 = vadd.xlane.f32.xlu0 %v1206
        %v1210 = vpop.xlane.xlu0 %1209
        %v1211 = vmul.f32 %v1208, 0.03125
        %v1212 = vmul.f32 %v1210, 0.03125
        %v1213 = vadd.f32 %v1211, 1e-05
        %v1214 = vadd.f32 %v1212, 1e-05
        %v1215 = vrsqrt.pop %v1213
        %v1216 = vrsqrt.pop %v1214
        %v1217 = vmul.f32 %v1203, %v1215
        %v1218 = vmul.f32 %v1204, %v1216
        %v1219 = vlaneseq
        %v1220 = vshrl.u32 %v1219, 7
        %v1221 = vsub.s32 0, %v1220
        %v1222 = vrot.slane %v333, %v1221
        %v1223 = vmul.f32 %v1217, %v1222
        %v1224 = vmul.f32 %v1218, %v1222
        %v1225 = vlaneseq
        %v1226 = vshrl.u32 %v1225, 7
        %v1227 = vsub.s32 1, %v1226
        %v1228 = vrot.slane %v333, %v1227
        %v1229 = vadd.f32 %v1223, %v1228
        %v1230 = vadd.f32 %v1224, %v1228
        %1231 = vst [vmem:[%s327] sm:$0xff] %v1229
        %1232 = vst [vmem:[%s327 + $0x8] sm:$0xff] %v1230
        %s1233 = sand.u32 %s164, 1
        %s1234 = scalar_lea.sflag [#allocation4], %s1233
        %s1235 = sand.u32 %s164, 1
        %s1236 = smul.addr %s1235, 16
        %s1237 = scalar_lea.vmem [#allocation11], %s1236
        // Predicated region
        $region65: #{tpu_custom_call.1} parent=43 // pred_check
          %p1238 = pneg %p174
        $region66: #{tpu_custom_call.1} parent=43 // pred_check_branch
          %1240 = sbr.rel (%p1238) target = $region68
        $region67: #{tpu_custom_call.1} parent=43 // pred_region
          %s1241 = smul.u32 2, %s25
          %s1243 = ssub.s32 256, 256
          %1244 = vsyncadd %s1234, %s1243
          %s1245 = smul.addr %s1241, 128
          %s1246 = scalar_lea.hbm %s6, %s1245
          %s1247 = sshll.u32 %s1237, 4
          %s1248 = int_to_ptr.vmem [resolvable:$true] %s1247
          %1253 = dma.vmem_to_hbm [thread:$0]  %s1248, 256, %s1246, %s1234, 128, 128, 8
        $region68: #{tpu_custom_call.1} parent=43 // pred_fallthru
          _
      $region44: #{tpu_custom_call.1} parent=5 // pred_fallthru
        _
      %p1254 = scmp.le.s32.totalorder 2, %s20
      // Predicated region
      $region69: #{tpu_custom_call.1} parent=5 // pred_check
        %p1255 = pneg %p1254
      $region70: #{tpu_custom_call.1} parent=5 // pred_check_branch
        %1257 = sbr.rel (%p1255) target = $region72
      $region71: #{tpu_custom_call.1} parent=5 // pred_region
        %s1258 = ssub.s32 %s20, 2
        // Predicated region
        $region73: #{tpu_custom_call.1} parent=71 // pred_check
          %p1259 = pneg %p180
        $region74: #{tpu_custom_call.1} parent=71 // pred_check_branch
          %1261 = sbr.rel (%p1259) target = $region76
        $region75: #{tpu_custom_call.1} parent=71 // pred_region
          %s1262 = sand.u32 %s165, 1
          %s1263 = scalar_lea.sflag [#allocation4], %s1262
          %s1264 = sand.u32 %s165, 1
          %s1265 = smul.addr %s1264, 16
          %s1266 = scalar_lea.vmem [#allocation11], %s1265
          %1267 = dma.done %s1263, 256
        $region76: #{tpu_custom_call.1} parent=71 // pred_fallthru
          _
      $region72: #{tpu_custom_call.1} parent=5 // pred_fallthru
        _
    $region6: #{tpu_custom_call.1} parent=1 // loop_footer
      %s24 = sadd.s32 1, %s20
    $region7: #{tpu_custom_call.1} parent=1 // loop_footer_branch
      %19 = sbr.rel target = $region3
    $region8: #{tpu_custom_call.1} parent=1 // loop_exit
      _
    %1268 = vsyncpa [#allocation3], 1
    %s1269 = scalar_lea.sflag [#allocation3], 1
    %1270 = vsyncpa %s1269, 1
    %1271 = vsyncpa [#allocation6], 1
    %1272 = vsyncpa [#allocation9], 1
    %1273 = vsyncpa [#allocation4], 1
    %s1274 = scalar_lea.sflag [#allocation4], 1
    %1275 = vsyncpa %s1274, 1

</llo_original>
